<compile_context>
chip_gen: v7x
topology: tpu7x:2x2x1
jax: 0.10.0
libtpu: 0.0.40
codegen_flags: <defaults>
</compile_context>

<pallas_src>
import functools
import math

import jax
import jax.numpy as jnp
from jax.experimental import pallas as pl
from jax.experimental.pallas import tpu as pltpu

PAD = 0
EPS = 1e-5  # nn.LayerNorm default


def _ln(x, g, b):
    mu = jnp.mean(x, axis=-1, keepdims=True)
    var = jnp.mean((x - mu) ** 2, axis=-1, keepdims=True)
    return (x - mu) * jax.lax.rsqrt(var + EPS) * g + b


def _pos_signal(length, channels, min_timescale=1.0, max_timescale=1.0e4):
    """NJUNMT sinusoidal position embedding: concat([sin, cos], channel dim)."""
    num_timescales = channels // 2
    log_inc = math.log(float(max_timescale) / float(min_timescale)) / max(num_timescales - 1, 1)
    inv_timescales = min_timescale * jnp.exp(
        jnp.arange(num_timescales, dtype=jnp.float32) * -log_inc)
    position = jnp.arange(length, dtype=jnp.float32)
    scaled_time = position[:, None] * inv_timescales[None, :]
    return jnp.concatenate([jnp.sin(scaled_time), jnp.cos(scaled_time)], axis=1)


# ----------------------------- fused kernel ---------------------------------
# grid = (batch_tiles [parallel], n_layers [arbitrary])
# state scratch (tile_b*L, D) carries the residual stream across layers.

def _encoder_kernel(emb_ref, bias_ref,
                    ln1_g_ref, ln1_b_ref,
                    wqkv_ref, bqkv_ref, wo_ref, bo_ref,
                    ffn_g_ref, ffn_b_ref, w1_ref, b1_ref, w2_ref, b2_ref,
                    fin_g_ref, fin_b_ref,
                    out_ref, state_ref,
                    *, n_head, dim_per_head, tile_b, seq):
    layer = pl.program_id(1)
    n_layers = pl.num_programs(1)
    hd = n_head * dim_per_head

    @pl.when(layer == 0)
    def _():
        state_ref[...] = emb_ref[...].astype(jnp.float32)

    x = state_ref[...]                                   # (tile_b*seq, d_model)

    # ---- pre-LN multi-head self-attention (dropout = identity) -------------
    xn = _ln(x, ln1_g_ref[0], ln1_b_ref[0])
    qkv = jnp.dot(xn, wqkv_ref[0], preferred_element_type=jnp.float32) + bqkv_ref[0]
    scale = 1.0 / math.sqrt(dim_per_head)
    q = qkv[:, 0 * hd:1 * hd] * scale
    k = qkv[:, 1 * hd:2 * hd]
    v = qkv[:, 2 * hd:3 * hd]
    bias = bias_ref[...]                                 # (tile_b, 1, seq) additive

    ctx_parts = []
    for h in range(n_head):                              # static unroll over heads
        sl = slice(h * dim_per_head, (h + 1) * dim_per_head)
        qh = q[:, sl].reshape(tile_b, seq, dim_per_head)
        kh = k[:, sl].reshape(tile_b, seq, dim_per_head)
        vh = v[:, sl].reshape(tile_b, seq, dim_per_head)
        s = jnp.einsum('bqd,bkd->bqk', qh, kh,
                       preferred_element_type=jnp.float32) + bias
        s = s - jnp.max(s, axis=-1, keepdims=True)
        e = jnp.exp(s)
        a = e / jnp.sum(e, axis=-1, keepdims=True)
        ch = jnp.einsum('bqk,bkd->bqd', a, vh,
                        preferred_element_type=jnp.float32)
        ctx_parts.append(ch.reshape(tile_b * seq, dim_per_head))
    ctx = jnp.concatenate(ctx_parts, axis=-1)            # (tile_b*seq, hd)

    attn_out = jnp.dot(ctx, wo_ref[0], preferred_element_type=jnp.float32) + bo_ref[0]
    y = attn_out + x                                     # residual

    # ---- position-wise feed-forward (pre-LN, ReLU, residual) ---------------
    yn = _ln(y, ffn_g_ref[0], ffn_b_ref[0])
    h1 = jnp.maximum(
        jnp.dot(yn, w1_ref[0], preferred_element_type=jnp.float32) + b1_ref[0], 0.0)
    h2 = jnp.dot(h1, w2_ref[0], preferred_element_type=jnp.float32) + b2_ref[0]
    new_x = h2 + y

    state_ref[...] = new_x

    @pl.when(layer == n_layers - 1)
    def _():
        out_ref[...] = _ln(new_x, fin_g_ref[...], fin_b_ref[...]).astype(out_ref.dtype)


# ------------------------------ wrapper --------------------------------------

def encoder_forward(params, src_seq, *, n_head, dim_per_head, tile_b=1):
    B, L = src_seq.shape
    D = params["emb"].shape[1]
    hd = n_head * dim_per_head
    d_inner = params["w1"].shape[-1]
    n_layers = params["wqkv"].shape[0]

    # Embeddings: word emb (PAD row is zero) * sqrt(d_model) + sinusoid PE.
    emb = jnp.take(params["emb"], src_seq, axis=0) * math.sqrt(D)
    emb = emb + _pos_signal(L, D)[None, :, :]
    emb2 = emb.reshape(B * L, D).astype(jnp.float32)

    enc_mask = (src_seq == PAD)                                   # (B, L) bool
    # additive attention bias, broadcast over query positions inside the kernel
    bias = jnp.where(enc_mask, -1e18, 0.0).astype(jnp.float32)[:, None, :]  # (B,1,L)

    assert B % tile_b == 0
    nb = B // tile_b
    m_tile = tile_b * L

    kern = functools.partial(_encoder_kernel, n_head=n_head,
                             dim_per_head=dim_per_head, tile_b=tile_b, seq=L)

    out2 = pl.pallas_call(
        kern,
        out_shape=jax.ShapeDtypeStruct((B * L, D), jnp.float32),
        grid=(nb, n_layers),
        in_specs=[
            pl.BlockSpec((m_tile, D), lambda b, l: (b, 0)),            # emb
            pl.BlockSpec((tile_b, 1, L), lambda b, l: (b, 0, 0)),      # additive mask
            pl.BlockSpec((1, 1, D), lambda b, l: (l, 0, 0)),           # ln1_g
            pl.BlockSpec((1, 1, D), lambda b, l: (l, 0, 0)),           # ln1_b
            pl.BlockSpec((1, D, 3 * hd), lambda b, l: (l, 0, 0)),      # wqkv
            pl.BlockSpec((1, 1, 3 * hd), lambda b, l: (l, 0, 0)),      # bqkv
            pl.BlockSpec((1, hd, D), lambda b, l: (l, 0, 0)),          # wo
            pl.BlockSpec((1, 1, D), lambda b, l: (l, 0, 0)),           # bo
            pl.BlockSpec((1, 1, D), lambda b, l: (l, 0, 0)),           # ffn ln g
            pl.BlockSpec((1, 1, D), lambda b, l: (l, 0, 0)),           # ffn ln b
            pl.BlockSpec((1, D, d_inner), lambda b, l: (l, 0, 0)),     # w1
            pl.BlockSpec((1, 1, d_inner), lambda b, l: (l, 0, 0)),     # b1
            pl.BlockSpec((1, d_inner, D), lambda b, l: (l, 0, 0)),     # w2
            pl.BlockSpec((1, 1, D), lambda b, l: (l, 0, 0)),           # b2
            pl.BlockSpec((1, D), lambda b, l: (0, 0)),                 # final ln g
            pl.BlockSpec((1, D), lambda b, l: (0, 0)),                 # final ln b
        ],
        out_specs=pl.BlockSpec((m_tile, D), lambda b, l: (b, 0)),
        scratch_shapes=[pltpu.VMEM((m_tile, D), jnp.float32)],
        compiler_params=pltpu.CompilerParams(
            dimension_semantics=("parallel", "arbitrary")),
    )(emb2, bias,
      params["ln1_g"], params["ln1_b"],
      params["wqkv"], params["bqkv"], params["wo"], params["bo"],
      params["ffn_g"], params["ffn_b"], params["w1"], params["b1"],
      params["w2"], params["b2"],
      params["fin_g"], params["fin_b"])

    return out2.reshape(B, L, D), enc_mask


# ----------------------- params & pure-JAX reference -------------------------

def init_params(key, *, n_vocab, n_layers, d_model, d_inner, n_head, dim_per_head):
    hd = n_head * dim_per_head
    keys = jax.random.split(key, 1 + n_layers)

    def w(k, shape, scale=0.05):
        return scale * jax.random.normal(k, shape, jnp.float32)

    emb = 0.1 * jax.random.normal(keys[0], (n_vocab, d_model), jnp.float32)
    emb = emb.at[PAD].set(0.0)                     # nn.Embedding(padding_idx=PAD)

    wqkv, wo, w1, w2 = [], [], [], []
    for i in range(n_layers):
        kq, kk, kv, ko, k1, k2 = jax.random.split(keys[1 + i], 6)
        wqkv.append(jnp.concatenate(
            [w(kq, (d_model, hd)), w(kk, (d_model, hd)), w(kv, (d_model, hd))], axis=-1))
        wo.append(w(ko, (hd, d_model)))
        w1.append(w(k1, (d_model, d_inner)))
        w2.append(w(k2, (d_inner, d_model)))

    z = lambda *s: jnp.zeros(s, jnp.float32)
    o = lambda *s: jnp.ones(s, jnp.float32)
    return {
        "emb": emb,
        "ln1_g": o(n_layers, 1, d_model), "ln1_b": z(n_layers, 1, d_model),
        "wqkv": jnp.stack(wqkv), "bqkv": z(n_layers, 1, 3 * hd),
        "wo": jnp.stack(wo), "bo": z(n_layers, 1, d_model),
        "ffn_g": o(n_layers, 1, d_model), "ffn_b": z(n_layers, 1, d_model),
        "w1": jnp.stack(w1), "b1": z(n_layers, 1, d_inner),
        "w2": jnp.stack(w2), "b2": z(n_layers, 1, d_model),
        "fin_g": o(1, d_model), "fin_b": z(1, d_model),
    }


def encoder_reference(params, src_seq, *, n_head, dim_per_head):
    """Pure-JAX mirror of the PyTorch Encoder forward (eval mode)."""
    B, L = src_seq.shape
    D = params["emb"].shape[1]
    hd = n_head * dim_per_head
    n_layers = params["wqkv"].shape[0]
    x = jnp.take(params["emb"], src_seq, axis=0) * math.sqrt(D) + _pos_signal(L, D)[None]
    enc_mask = (src_seq == PAD)
    scale = 1.0 / math.sqrt(dim_per_head)
    for i in range(n_layers):
        xn = _ln(x, params["ln1_g"][i], params["ln1_b"][i])
        qkv = xn @ params["wqkv"][i] + params["bqkv"][i]
        q, k, v = jnp.split(qkv, 3, axis=-1)
        qh = (q * scale).reshape(B, L, n_head, dim_per_head).transpose(0, 2, 1, 3)
        kh = k.reshape(B, L, n_head, dim_per_head).transpose(0, 2, 1, 3)
        vh = v.reshape(B, L, n_head, dim_per_head).transpose(0, 2, 1, 3)
        s = jnp.einsum('bhqd,bhkd->bhqk', qh, kh)
        s = jnp.where(enc_mask[:, None, None, :], -1e18, s)
        a = jax.nn.softmax(s, axis=-1)
        ctx = jnp.einsum('bhqk,bhkd->bhqd', a, vh).transpose(0, 2, 1, 3).reshape(B, L, hd)
        y = ctx @ params["wo"][i] + params["bo"][i] + x
        yn = _ln(y, params["ffn_g"][i], params["ffn_b"][i])
        h1 = jax.nn.relu(yn @ params["w1"][i] + params["b1"][i])
        x = h1 @ params["w2"][i] + params["b2"][i] + y
    return _ln(x, params["fin_g"], params["fin_b"]), enc_mask


if __name__ == "__main__":
    N_VOCAB, N_LAYERS = 17, 2
    D_MODEL, D_INNER = 32, 64
    N_HEAD, DIM_PER_HEAD = 4, 8
    B, L = 2, 8

    key = jax.random.PRNGKey(0)
    kp, kd = jax.random.split(key)
    params = init_params(kp, n_vocab=N_VOCAB, n_layers=N_LAYERS, d_model=D_MODEL,
                         d_inner=D_INNER, n_head=N_HEAD, dim_per_head=DIM_PER_HEAD)

    src_seq = jax.random.randint(kd, (B, L), 1, N_VOCAB)   # non-PAD tokens
    src_seq = src_seq.at[1, L - 3:].set(PAD)               # pad the tail of sample 1

    fwd = jax.jit(functools.partial(encoder_forward, n_head=N_HEAD,
                                    dim_per_head=DIM_PER_HEAD, tile_b=1))
    out, enc_mask = fwd(params, src_seq)
    jax.block_until_ready(out)
    jax.block_until_ready(enc_mask)

    ref_out, ref_mask = encoder_reference(params, src_seq, n_head=N_HEAD,
                                          dim_per_head=DIM_PER_HEAD)
    assert out.shape == (B, L, D_MODEL)
    assert enc_mask.shape == (B, L)
    assert bool(jnp.all(enc_mask == ref_mask))
    err = float(jnp.max(jnp.abs(out - ref_out)))
    assert err < 5e-2, f"max abs error {err}"
    print("KERNEL_OK")
</pallas_src>

<mosaic_0001>
module attributes {stable_mosaic.version = 11 : i64} {
  func.func @_encoder_kernel(%arg0: i32, %arg1: i32, %arg2: memref<8x32xf32, #tpu.memory_space<vmem>>, %arg3: memref<1x1x8xf32, #tpu.memory_space<vmem>>, %arg4: memref<1x1x32xf32, #tpu.memory_space<vmem>>, %arg5: memref<1x1x32xf32, #tpu.memory_space<vmem>>, %arg6: memref<1x32x96xf32, #tpu.memory_space<vmem>>, %arg7: memref<1x1x96xf32, #tpu.memory_space<vmem>>, %arg8: memref<1x32x32xf32, #tpu.memory_space<vmem>>, %arg9: memref<1x1x32xf32, #tpu.memory_space<vmem>>, %arg10: memref<1x1x32xf32, #tpu.memory_space<vmem>>, %arg11: memref<1x1x32xf32, #tpu.memory_space<vmem>>, %arg12: memref<1x32x64xf32, #tpu.memory_space<vmem>>, %arg13: memref<1x1x64xf32, #tpu.memory_space<vmem>>, %arg14: memref<1x64x32xf32, #tpu.memory_space<vmem>>, %arg15: memref<1x1x32xf32, #tpu.memory_space<vmem>>, %arg16: memref<1x32xf32, #tpu.memory_space<vmem>>, %arg17: memref<1x32xf32, #tpu.memory_space<vmem>>, %arg18: memref<8x32xf32, #tpu.memory_space<vmem>>, %arg19: memref<8x32xf32, #tpu.memory_space<vmem>>) attributes {dimension_semantics = [#tpu.dimension_semantics<parallel>, #tpu.dimension_semantics<arbitrary>], iteration_bounds = array<i64: 2, 2>, scalar_prefetch = 0 : i64, scratch_operands = 1 : i64, tpu.core_type = #tpu.core_type<tc>, window_params = [{transform_indices = @transform_0, window_bounds = array<i64: 8, 32>}, {transform_indices = @transform_1, window_bounds = array<i64: 1, 1, 8>}, {transform_indices = @transform_2, window_bounds = array<i64: 1, 1, 32>}, {transform_indices = @transform_3, window_bounds = array<i64: 1, 1, 32>}, {transform_indices = @transform_4, window_bounds = array<i64: 1, 32, 96>}, {transform_indices = @transform_5, window_bounds = array<i64: 1, 1, 96>}, {transform_indices = @transform_6, window_bounds = array<i64: 1, 32, 32>}, {transform_indices = @transform_7, window_bounds = array<i64: 1, 1, 32>}, {transform_indices = @transform_8, window_bounds = array<i64: 1, 1, 32>}, {transform_indices = @transform_9, window_bounds = array<i64: 1, 1, 32>}, {transform_indices = @transform_10, window_bounds = array<i64: 1, 32, 64>}, {transform_indices = @transform_11, window_bounds = array<i64: 1, 1, 64>}, {transform_indices = @transform_12, window_bounds = array<i64: 1, 64, 32>}, {transform_indices = @transform_13, window_bounds = array<i64: 1, 1, 32>}, {pipeline_mode = #tpu.pipeline_mode<synchronous>, transform_indices = @transform_14, window_bounds = array<i64: 1, 32>}, {pipeline_mode = #tpu.pipeline_mode<synchronous>, transform_indices = @transform_15, window_bounds = array<i64: 1, 32>}, {transform_indices = @transform_16, window_bounds = array<i64: 8, 32>}]} {
    %c0_i32 = arith.constant 0 : i32
    %0 = arith.cmpi eq, %arg1, %c0_i32 : i32
    %1 = arith.extui %0 : i1 to i32
    %c0_i32_0 = arith.constant 0 : i32
    %2 = arith.cmpi ne, %1, %c0_i32_0 : i32
    scf.if %2 {
      %c0_75 = arith.constant 0 : index
      %c0_76 = arith.constant 0 : index
      %179 = vector.load %arg2[%c0_75, %c0_76] : memref<8x32xf32, #tpu.memory_space<vmem>>, vector<8x32xf32>
      %c0_77 = arith.constant 0 : index
      %c0_78 = arith.constant 0 : index
      %180 = vector.load %arg19[%c0_77, %c0_78] : memref<8x32xf32, #tpu.memory_space<vmem>>, vector<8x32xf32>
      tpu.vector_store %arg19[%c0_77, %c0_78], %179 {strides = array<i32>} : memref<8x32xf32, #tpu.memory_space<vmem>>, vector<8x32xf32>,
    } else {
    }
    %c0 = arith.constant 0 : index
    %c0_1 = arith.constant 0 : index
    %3 = vector.load %arg19[%c0, %c0_1] : memref<8x32xf32, #tpu.memory_space<vmem>>, vector<8x32xf32>
    %c0_2 = arith.constant 0 : index
    %c0_3 = arith.constant 0 : index
    %c0_4 = arith.constant 0 : index
    %4 = vector.load %arg4[%c0_2, %c0_3, %c0_4] : memref<1x1x32xf32, #tpu.memory_space<vmem>>, vector<1x1x32xf32>
    %5 = vector.shape_cast %4 : vector<1x1x32xf32> to vector<1x32xf32>
    %c0_5 = arith.constant 0 : index
    %c0_6 = arith.constant 0 : index
    %c0_7 = arith.constant 0 : index
    %6 = vector.load %arg5[%c0_5, %c0_6, %c0_7] : memref<1x1x32xf32, #tpu.memory_space<vmem>>, vector<1x1x32xf32>
    %7 = vector.shape_cast %6 : vector<1x1x32xf32> to vector<1x32xf32>
    %cst = arith.constant dense<0.000000e+00> : vector<8xf32>
    %8 = vector.multi_reduction <add>, %3, %cst [1] : vector<8x32xf32> to vector<8xf32>
    %9 = vector.shape_cast %8 : vector<8xf32> to vector<8x1xf32>
    %cst_8 = arith.constant 3.200000e+01 : f32
    %10 = vector.broadcast %cst_8 : f32 to vector<8x1xf32>
    %11 = arith.divf %9, %10 : vector<8x1xf32>
    %12 = vector.broadcast %11 : vector<8x1xf32> to vector<8x32xf32>
    %13 = arith.subf %3, %12 : vector<8x32xf32>
    %14 = arith.mulf %13, %13 : vector<8x32xf32>
    %cst_9 = arith.constant dense<0.000000e+00> : vector<8xf32>
    %15 = vector.multi_reduction <add>, %14, %cst_9 [1] : vector<8x32xf32> to vector<8xf32>
    %16 = vector.shape_cast %15 : vector<8xf32> to vector<8x1xf32>
    %cst_10 = arith.constant 3.200000e+01 : f32
    %17 = vector.broadcast %cst_10 : f32 to vector<8x1xf32>
    %18 = arith.divf %16, %17 : vector<8x1xf32>
    %19 = vector.broadcast %11 : vector<8x1xf32> to vector<8x32xf32>
    %20 = arith.subf %3, %19 : vector<8x32xf32>
    %cst_11 = arith.constant 9.99999974E-6 : f32
    %21 = vector.broadcast %cst_11 : f32 to vector<8x1xf32>
    %22 = arith.addf %18, %21 : vector<8x1xf32>
    %23 = math.rsqrt %22 : vector<8x1xf32>
    %24 = vector.broadcast %23 : vector<8x1xf32> to vector<8x32xf32>
    %25 = arith.mulf %20, %24 : vector<8x32xf32>
    %26 = vector.broadcast %5 : vector<1x32xf32> to vector<8x32xf32>
    %27 = arith.mulf %25, %26 : vector<8x32xf32>
    %28 = vector.broadcast %7 : vector<1x32xf32> to vector<8x32xf32>
    %29 = arith.addf %27, %28 : vector<8x32xf32>
    %c0_12 = arith.constant 0 : index
    %c0_13 = arith.constant 0 : index
    %c0_14 = arith.constant 0 : index
    %30 = vector.load %arg6[%c0_12, %c0_13, %c0_14] : memref<1x32x96xf32, #tpu.memory_space<vmem>>, vector<1x32x96xf32>
    %31 = vector.shape_cast %30 : vector<1x32x96xf32> to vector<32x96xf32>
    %cst_15 = arith.constant dense<0.000000e+00> : vector<8x96xf32>
    %32 = tpu.matmul %29, %31, %cst_15 {dimension_numbers = #tpu.dot_dimension_numbers<[1], [0], [0], [1], [0, 0, 1, 1], [], []>} : vector<8x32xf32>, vector<32x96xf32>, vector<8x96xf32> -> vector<8x96xf32>
    %c0_16 = arith.constant 0 : index
    %c0_17 = arith.constant 0 : index
    %c0_18 = arith.constant 0 : index
    %33 = vector.load %arg7[%c0_16, %c0_17, %c0_18] : memref<1x1x96xf32, #tpu.memory_space<vmem>>, vector<1x1x96xf32>
    %34 = vector.shape_cast %33 : vector<1x1x96xf32> to vector<1x96xf32>
    %35 = vector.broadcast %34 : vector<1x96xf32> to vector<8x96xf32>
    %36 = arith.addf %32, %35 : vector<8x96xf32>
    %37 = vector.extract_strided_slice %36 {offsets = [0, 0], sizes = [8, 32], strides = [1, 1]} : vector<8x96xf32> to vector<8x32xf32>
    %cst_19 = arith.constant 0.353553385 : f32
    %38 = vector.broadcast %cst_19 : f32 to vector<8x32xf32>
    %39 = arith.mulf %37, %38 : vector<8x32xf32>
    %40 = vector.extract_strided_slice %36 {offsets = [0, 32], sizes = [8, 32], strides = [1, 1]} : vector<8x96xf32> to vector<8x32xf32>
    %41 = vector.extract_strided_slice %36 {offsets = [0, 64], sizes = [8, 32], strides = [1, 1]} : vector<8x96xf32> to vector<8x32xf32>
    %c0_20 = arith.constant 0 : index
    %c0_21 = arith.constant 0 : index
    %c0_22 = arith.constant 0 : index
    %42 = vector.load %arg3[%c0_20, %c0_21, %c0_22] : memref<1x1x8xf32, #tpu.memory_space<vmem>>, vector<1x1x8xf32>
    %43 = vector.extract_strided_slice %39 {offsets = [0, 0], sizes = [8, 8], strides = [1, 1]} : vector<8x32xf32> to vector<8x8xf32>
    %44 = vector.shape_cast %43 : vector<8x8xf32> to vector<1x8x8xf32>
    %45 = vector.extract_strided_slice %40 {offsets = [0, 0], sizes = [8, 8], strides = [1, 1]} : vector<8x32xf32> to vector<8x8xf32>
    %46 = vector.shape_cast %45 : vector<8x8xf32> to vector<1x8x8xf32>
    %47 = vector.extract_strided_slice %41 {offsets = [0, 0], sizes = [8, 8], strides = [1, 1]} : vector<8x32xf32> to vector<8x8xf32>
    %48 = vector.shape_cast %47 : vector<8x8xf32> to vector<1x8x8xf32>
    "tpu.trace_start"() <{level = 10 : i32, message = "bqd,bkd->bqk"}> : () -> ()
    %cst_23 = arith.constant dense<0.000000e+00> : vector<1x8x8xf32>
    %49 = tpu.matmul %44, %46, %cst_23 {dimension_numbers = #tpu.dot_dimension_numbers<[2], [2], [1], [1], [0, 0, 0, 1, 1, 1], [0], [0]>} : vector<1x8x8xf32>, vector<1x8x8xf32>, vector<1x8x8xf32> -> vector<1x8x8xf32>
    "tpu.trace_stop"() : () -> ()
    %50 = vector.broadcast %42 : vector<1x1x8xf32> to vector<1x8x8xf32>
    %51 = arith.addf %49, %50 : vector<1x8x8xf32>
    %cst_24 = arith.constant dense<0xFF800000> : vector<1x8xf32>
    %52 = vector.multi_reduction <maximumf>, %51, %cst_24 [2] : vector<1x8x8xf32> to vector<1x8xf32>
    %53 = vector.shape_cast %52 : vector<1x8xf32> to vector<1x8x1xf32>
    %54 = vector.broadcast %53 : vector<1x8x1xf32> to vector<1x8x8xf32>
    %55 = arith.subf %51, %54 : vector<1x8x8xf32>
    %56 = math.exp %55 : vector<1x8x8xf32>
    %cst_25 = arith.constant dense<0.000000e+00> : vector<1x8xf32>
    %57 = vector.multi_reduction <add>, %56, %cst_25 [2] : vector<1x8x8xf32> to vector<1x8xf32>
    %58 = vector.shape_cast %57 : vector<1x8xf32> to vector<1x8x1xf32>
    %59 = vector.broadcast %58 : vector<1x8x1xf32> to vector<1x8x8xf32>
    %60 = arith.divf %56, %59 : vector<1x8x8xf32>
    "tpu.trace_start"() <{level = 10 : i32, message = "bqk,bkd->bqd"}> : () -> ()
    %cst_26 = arith.constant dense<0.000000e+00> : vector<1x8x8xf32>
    %61 = tpu.matmul %60, %48, %cst_26 {dimension_numbers = #tpu.dot_dimension_numbers<[2], [1], [1], [2], [0, 0, 0, 1, 1, 2], [0], [0]>} : vector<1x8x8xf32>, vector<1x8x8xf32>, vector<1x8x8xf32> -> vector<1x8x8xf32>
    "tpu.trace_stop"() : () -> ()
    %62 = vector.shape_cast %61 : vector<1x8x8xf32> to vector<8x8xf32>
    %63 = vector.extract_strided_slice %39 {offsets = [0, 8], sizes = [8, 8], strides = [1, 1]} : vector<8x32xf32> to vector<8x8xf32>
    %64 = vector.shape_cast %63 : vector<8x8xf32> to vector<1x8x8xf32>
    %65 = vector.extract_strided_slice %40 {offsets = [0, 8], sizes = [8, 8], strides = [1, 1]} : vector<8x32xf32> to vector<8x8xf32>
    %66 = vector.shape_cast %65 : vector<8x8xf32> to vector<1x8x8xf32>
    %67 = vector.extract_strided_slice %41 {offsets = [0, 8], sizes = [8, 8], strides = [1, 1]} : vector<8x32xf32> to vector<8x8xf32>
    %68 = vector.shape_cast %67 : vector<8x8xf32> to vector<1x8x8xf32>
    "tpu.trace_start"() <{level = 10 : i32, message = "bqd,bkd->bqk"}> : () -> ()
    %cst_27 = arith.constant dense<0.000000e+00> : vector<1x8x8xf32>
    %69 = tpu.matmul %64, %66, %cst_27 {dimension_numbers = #tpu.dot_dimension_numbers<[2], [2], [1], [1], [0, 0, 0, 1, 1, 1], [0], [0]>} : vector<1x8x8xf32>, vector<1x8x8xf32>, vector<1x8x8xf32> -> vector<1x8x8xf32>
    "tpu.trace_stop"() : () -> ()
    %70 = vector.broadcast %42 : vector<1x1x8xf32> to vector<1x8x8xf32>
    %71 = arith.addf %69, %70 : vector<1x8x8xf32>
    %cst_28 = arith.constant dense<0xFF800000> : vector<1x8xf32>
    %72 = vector.multi_reduction <maximumf>, %71, %cst_28 [2] : vector<1x8x8xf32> to vector<1x8xf32>
    %73 = vector.shape_cast %72 : vector<1x8xf32> to vector<1x8x1xf32>
    %74 = vector.broadcast %73 : vector<1x8x1xf32> to vector<1x8x8xf32>
    %75 = arith.subf %71, %74 : vector<1x8x8xf32>
    %76 = math.exp %75 : vector<1x8x8xf32>
    %cst_29 = arith.constant dense<0.000000e+00> : vector<1x8xf32>
    %77 = vector.multi_reduction <add>, %76, %cst_29 [2] : vector<1x8x8xf32> to vector<1x8xf32>
    %78 = vector.shape_cast %77 : vector<1x8xf32> to vector<1x8x1xf32>
    %79 = vector.broadcast %78 : vector<1x8x1xf32> to vector<1x8x8xf32>
    %80 = arith.divf %76, %79 : vector<1x8x8xf32>
    "tpu.trace_start"() <{level = 10 : i32, message = "bqk,bkd->bqd"}> : () -> ()
    %cst_30 = arith.constant dense<0.000000e+00> : vector<1x8x8xf32>
    %81 = tpu.matmul %80, %68, %cst_30 {dimension_numbers = #tpu.dot_dimension_numbers<[2], [1], [1], [2], [0, 0, 0, 1, 1, 2], [0], [0]>} : vector<1x8x8xf32>, vector<1x8x8xf32>, vector<1x8x8xf32> -> vector<1x8x8xf32>
    "tpu.trace_stop"() : () -> ()
    %82 = vector.shape_cast %81 : vector<1x8x8xf32> to vector<8x8xf32>
    %83 = vector.extract_strided_slice %39 {offsets = [0, 16], sizes = [8, 8], strides = [1, 1]} : vector<8x32xf32> to vector<8x8xf32>
    %84 = vector.shape_cast %83 : vector<8x8xf32> to vector<1x8x8xf32>
    %85 = vector.extract_strided_slice %40 {offsets = [0, 16], sizes = [8, 8], strides = [1, 1]} : vector<8x32xf32> to vector<8x8xf32>
    %86 = vector.shape_cast %85 : vector<8x8xf32> to vector<1x8x8xf32>
    %87 = vector.extract_strided_slice %41 {offsets = [0, 16], sizes = [8, 8], strides = [1, 1]} : vector<8x32xf32> to vector<8x8xf32>
    %88 = vector.shape_cast %87 : vector<8x8xf32> to vector<1x8x8xf32>
    "tpu.trace_start"() <{level = 10 : i32, message = "bqd,bkd->bqk"}> : () -> ()
    %cst_31 = arith.constant dense<0.000000e+00> : vector<1x8x8xf32>
    %89 = tpu.matmul %84, %86, %cst_31 {dimension_numbers = #tpu.dot_dimension_numbers<[2], [2], [1], [1], [0, 0, 0, 1, 1, 1], [0], [0]>} : vector<1x8x8xf32>, vector<1x8x8xf32>, vector<1x8x8xf32> -> vector<1x8x8xf32>
    "tpu.trace_stop"() : () -> ()
    %90 = vector.broadcast %42 : vector<1x1x8xf32> to vector<1x8x8xf32>
    %91 = arith.addf %89, %90 : vector<1x8x8xf32>
    %cst_32 = arith.constant dense<0xFF800000> : vector<1x8xf32>
    %92 = vector.multi_reduction <maximumf>, %91, %cst_32 [2] : vector<1x8x8xf32> to vector<1x8xf32>
    %93 = vector.shape_cast %92 : vector<1x8xf32> to vector<1x8x1xf32>
    %94 = vector.broadcast %93 : vector<1x8x1xf32> to vector<1x8x8xf32>
    %95 = arith.subf %91, %94 : vector<1x8x8xf32>
    %96 = math.exp %95 : vector<1x8x8xf32>
    %cst_33 = arith.constant dense<0.000000e+00> : vector<1x8xf32>
    %97 = vector.multi_reduction <add>, %96, %cst_33 [2] : vector<1x8x8xf32> to vector<1x8xf32>
    %98 = vector.shape_cast %97 : vector<1x8xf32> to vector<1x8x1xf32>
    %99 = vector.broadcast %98 : vector<1x8x1xf32> to vector<1x8x8xf32>
    %100 = arith.divf %96, %99 : vector<1x8x8xf32>
    "tpu.trace_start"() <{level = 10 : i32, message = "bqk,bkd->bqd"}> : () -> ()
    %cst_34 = arith.constant dense<0.000000e+00> : vector<1x8x8xf32>
    %101 = tpu.matmul %100, %88, %cst_34 {dimension_numbers = #tpu.dot_dimension_numbers<[2], [1], [1], [2], [0, 0, 0, 1, 1, 2], [0], [0]>} : vector<1x8x8xf32>, vector<1x8x8xf32>, vector<1x8x8xf32> -> vector<1x8x8xf32>
    "tpu.trace_stop"() : () -> ()
    %102 = vector.shape_cast %101 : vector<1x8x8xf32> to vector<8x8xf32>
    %103 = vector.extract_strided_slice %39 {offsets = [0, 24], sizes = [8, 8], strides = [1, 1]} : vector<8x32xf32> to vector<8x8xf32>
    %104 = vector.shape_cast %103 : vector<8x8xf32> to vector<1x8x8xf32>
    %105 = vector.extract_strided_slice %40 {offsets = [0, 24], sizes = [8, 8], strides = [1, 1]} : vector<8x32xf32> to vector<8x8xf32>
    %106 = vector.shape_cast %105 : vector<8x8xf32> to vector<1x8x8xf32>
    %107 = vector.extract_strided_slice %41 {offsets = [0, 24], sizes = [8, 8], strides = [1, 1]} : vector<8x32xf32> to vector<8x8xf32>
    %108 = vector.shape_cast %107 : vector<8x8xf32> to vector<1x8x8xf32>
    "tpu.trace_start"() <{level = 10 : i32, message = "bqd,bkd->bqk"}> : () -> ()
    %cst_35 = arith.constant dense<0.000000e+00> : vector<1x8x8xf32>
    %109 = tpu.matmul %104, %106, %cst_35 {dimension_numbers = #tpu.dot_dimension_numbers<[2], [2], [1], [1], [0, 0, 0, 1, 1, 1], [0], [0]>} : vector<1x8x8xf32>, vector<1x8x8xf32>, vector<1x8x8xf32> -> vector<1x8x8xf32>
    "tpu.trace_stop"() : () -> ()
    %110 = vector.broadcast %42 : vector<1x1x8xf32> to vector<1x8x8xf32>
    %111 = arith.addf %109, %110 : vector<1x8x8xf32>
    %cst_36 = arith.constant dense<0xFF800000> : vector<1x8xf32>
    %112 = vector.multi_reduction <maximumf>, %111, %cst_36 [2] : vector<1x8x8xf32> to vector<1x8xf32>
    %113 = vector.shape_cast %112 : vector<1x8xf32> to vector<1x8x1xf32>
    %114 = vector.broadcast %113 : vector<1x8x1xf32> to vector<1x8x8xf32>
    %115 = arith.subf %111, %114 : vector<1x8x8xf32>
    %116 = math.exp %115 : vector<1x8x8xf32>
    %cst_37 = arith.constant dense<0.000000e+00> : vector<1x8xf32>
    %117 = vector.multi_reduction <add>, %116, %cst_37 [2] : vector<1x8x8xf32> to vector<1x8xf32>
    %118 = vector.shape_cast %117 : vector<1x8xf32> to vector<1x8x1xf32>
    %119 = vector.broadcast %118 : vector<1x8x1xf32> to vector<1x8x8xf32>
    %120 = arith.divf %116, %119 : vector<1x8x8xf32>
    "tpu.trace_start"() <{level = 10 : i32, message = "bqk,bkd->bqd"}> : () -> ()
    %cst_38 = arith.constant dense<0.000000e+00> : vector<1x8x8xf32>
    %121 = tpu.matmul %120, %108, %cst_38 {dimension_numbers = #tpu.dot_dimension_numbers<[2], [1], [1], [2], [0, 0, 0, 1, 1, 2], [0], [0]>} : vector<1x8x8xf32>, vector<1x8x8xf32>, vector<1x8x8xf32> -> vector<1x8x8xf32>
    "tpu.trace_stop"() : () -> ()
    %122 = vector.shape_cast %121 : vector<1x8x8xf32> to vector<8x8xf32>
    %123 = tpu.concatenate %62, %82, %102, %122 in 1 : vector<8x8xf32>, vector<8x8xf32>, vector<8x8xf32>, vector<8x8xf32> -> vector<8x32xf32>
    %c0_39 = arith.constant 0 : index
    %c0_40 = arith.constant 0 : index
    %c0_41 = arith.constant 0 : index
    %124 = vector.load %arg8[%c0_39, %c0_40, %c0_41] : memref<1x32x32xf32, #tpu.memory_space<vmem>>, vector<1x32x32xf32>
    %125 = vector.shape_cast %124 : vector<1x32x32xf32> to vector<32x32xf32>
    %cst_42 = arith.constant dense<0.000000e+00> : vector<8x32xf32>
    %126 = tpu.matmul %123, %125, %cst_42 {dimension_numbers = #tpu.dot_dimension_numbers<[1], [0], [0], [1], [0, 0, 1, 1], [], []>} : vector<8x32xf32>, vector<32x32xf32>, vector<8x32xf32> -> vector<8x32xf32>
    %c0_43 = arith.constant 0 : index
    %c0_44 = arith.constant 0 : index
    %c0_45 = arith.constant 0 : index
    %127 = vector.load %arg9[%c0_43, %c0_44, %c0_45] : memref<1x1x32xf32, #tpu.memory_space<vmem>>, vector<1x1x32xf32>
    %128 = vector.shape_cast %127 : vector<1x1x32xf32> to vector<1x32xf32>
    %129 = vector.broadcast %128 : vector<1x32xf32> to vector<8x32xf32>
    %130 = arith.addf %126, %129 : vector<8x32xf32>
    %131 = arith.addf %130, %3 : vector<8x32xf32>
    %c0_46 = arith.constant 0 : index
    %c0_47 = arith.constant 0 : index
    %c0_48 = arith.constant 0 : index
    %132 = vector.load %arg10[%c0_46, %c0_47, %c0_48] : memref<1x1x32xf32, #tpu.memory_space<vmem>>, vector<1x1x32xf32>
    %133 = vector.shape_cast %132 : vector<1x1x32xf32> to vector<1x32xf32>
    %c0_49 = arith.constant 0 : index
    %c0_50 = arith.constant 0 : index
    %c0_51 = arith.constant 0 : index
    %134 = vector.load %arg11[%c0_49, %c0_50, %c0_51] : memref<1x1x32xf32, #tpu.memory_space<vmem>>, vector<1x1x32xf32>
    %135 = vector.shape_cast %134 : vector<1x1x32xf32> to vector<1x32xf32>
    %cst_52 = arith.constant dense<0.000000e+00> : vector<8xf32>
    %136 = vector.multi_reduction <add>, %131, %cst_52 [1] : vector<8x32xf32> to vector<8xf32>
    %137 = vector.shape_cast %136 : vector<8xf32> to vector<8x1xf32>
    %cst_53 = arith.constant 3.200000e+01 : f32
    %138 = vector.broadcast %cst_53 : f32 to vector<8x1xf32>
    %139 = arith.divf %137, %138 : vector<8x1xf32>
    %140 = vector.broadcast %139 : vector<8x1xf32> to vector<8x32xf32>
    %141 = arith.subf %131, %140 : vector<8x32xf32>
    %142 = arith.mulf %141, %141 : vector<8x32xf32>
    %cst_54 = arith.constant dense<0.000000e+00> : vector<8xf32>
    %143 = vector.multi_reduction <add>, %142, %cst_54 [1] : vector<8x32xf32> to vector<8xf32>
    %144 = vector.shape_cast %143 : vector<8xf32> to vector<8x1xf32>
    %cst_55 = arith.constant 3.200000e+01 : f32
    %145 = vector.broadcast %cst_55 : f32 to vector<8x1xf32>
    %146 = arith.divf %144, %145 : vector<8x1xf32>
    %147 = vector.broadcast %139 : vector<8x1xf32> to vector<8x32xf32>
    %148 = arith.subf %131, %147 : vector<8x32xf32>
    %cst_56 = arith.constant 9.99999974E-6 : f32
    %149 = vector.broadcast %cst_56 : f32 to vector<8x1xf32>
    %150 = arith.addf %146, %149 : vector<8x1xf32>
    %151 = math.rsqrt %150 : vector<8x1xf32>
    %152 = vector.broadcast %151 : vector<8x1xf32> to vector<8x32xf32>
    %153 = arith.mulf %148, %152 : vector<8x32xf32>
    %154 = vector.broadcast %133 : vector<1x32xf32> to vector<8x32xf32>
    %155 = arith.mulf %153, %154 : vector<8x32xf32>
    %156 = vector.broadcast %135 : vector<1x32xf32> to vector<8x32xf32>
    %157 = arith.addf %155, %156 : vector<8x32xf32>
    %c0_57 = arith.constant 0 : index
    %c0_58 = arith.constant 0 : index
    %c0_59 = arith.constant 0 : index
    %158 = vector.load %arg12[%c0_57, %c0_58, %c0_59] : memref<1x32x64xf32, #tpu.memory_space<vmem>>, vector<1x32x64xf32>
    %159 = vector.shape_cast %158 : vector<1x32x64xf32> to vector<32x64xf32>
    %cst_60 = arith.constant dense<0.000000e+00> : vector<8x64xf32>
    %160 = tpu.matmul %157, %159, %cst_60 {dimension_numbers = #tpu.dot_dimension_numbers<[1], [0], [0], [1], [0, 0, 1, 1], [], []>} : vector<8x32xf32>, vector<32x64xf32>, vector<8x64xf32> -> vector<8x64xf32>
    %c0_61 = arith.constant 0 : index
    %c0_62 = arith.constant 0 : index
    %c0_63 = arith.constant 0 : index
    %161 = vector.load %arg13[%c0_61, %c0_62, %c0_63] : memref<1x1x64xf32, #tpu.memory_space<vmem>>, vector<1x1x64xf32>
    %162 = vector.shape_cast %161 : vector<1x1x64xf32> to vector<1x64xf32>
    %163 = vector.broadcast %162 : vector<1x64xf32> to vector<8x64xf32>
    %164 = arith.addf %160, %163 : vector<8x64xf32>
    %cst_64 = arith.constant 0.000000e+00 : f32
    %165 = vector.broadcast %cst_64 : f32 to vector<8x64xf32>
    %166 = arith.maximumf %164, %165 : vector<8x64xf32>
    %c0_65 = arith.constant 0 : index
    %c0_66 = arith.constant 0 : index
    %c0_67 = arith.constant 0 : index
    %167 = vector.load %arg14[%c0_65, %c0_66, %c0_67] : memref<1x64x32xf32, #tpu.memory_space<vmem>>, vector<1x64x32xf32>
    %168 = vector.shape_cast %167 : vector<1x64x32xf32> to vector<64x32xf32>
    %cst_68 = arith.constant dense<0.000000e+00> : vector<8x32xf32>
    %169 = tpu.matmul %166, %168, %cst_68 {dimension_numbers = #tpu.dot_dimension_numbers<[1], [0], [0], [1], [0, 0, 1, 1], [], []>} : vector<8x64xf32>, vector<64x32xf32>, vector<8x32xf32> -> vector<8x32xf32>
    %c0_69 = arith.constant 0 : index
    %c0_70 = arith.constant 0 : index
    %c0_71 = arith.constant 0 : index
    %170 = vector.load %arg15[%c0_69, %c0_70, %c0_71] : memref<1x1x32xf32, #tpu.memory_space<vmem>>, vector<1x1x32xf32>
    %171 = vector.shape_cast %170 : vector<1x1x32xf32> to vector<1x32xf32>
    %172 = vector.broadcast %171 : vector<1x32xf32> to vector<8x32xf32>
    %173 = arith.addf %169, %172 : vector<8x32xf32>
    %174 = arith.addf %173, %131 : vector<8x32xf32>
    %c0_72 = arith.constant 0 : index
    %c0_73 = arith.constant 0 : index
    %175 = vector.load %arg19[%c0_72, %c0_73] : memref<8x32xf32, #tpu.memory_space<vmem>>, vector<8x32xf32>
    tpu.vector_store %arg19[%c0_72, %c0_73], %174 {strides = array<i32>} : memref<8x32xf32, #tpu.memory_space<vmem>>, vector<8x32xf32>,
    %c1_i32 = arith.constant 1 : i32
    %176 = arith.cmpi eq, %arg1, %c1_i32 : i32
    %177 = arith.extui %176 : i1 to i32
    %c0_i32_74 = arith.constant 0 : i32
    %178 = arith.cmpi ne, %177, %c0_i32_74 : i32
    scf.if %178 {
      %c0_75 = arith.constant 0 : index
      %c0_76 = arith.constant 0 : index
      %179 = vector.load %arg16[%c0_75, %c0_76] : memref<1x32xf32, #tpu.memory_space<vmem>>, vector<1x32xf32>
      %c0_77 = arith.constant 0 : index
      %c0_78 = arith.constant 0 : index
      %180 = vector.load %arg17[%c0_77, %c0_78] : memref<1x32xf32, #tpu.memory_space<vmem>>, vector<1x32xf32>
      %cst_79 = arith.constant dense<0.000000e+00> : vector<8xf32>
      %181 = vector.multi_reduction <add>, %174, %cst_79 [1] : vector<8x32xf32> to vector<8xf32>
      %182 = vector.shape_cast %181 : vector<8xf32> to vector<8x1xf32>
      %cst_80 = arith.constant 3.200000e+01 : f32
      %183 = vector.broadcast %cst_80 : f32 to vector<8x1xf32>
      %184 = arith.divf %182, %183 : vector<8x1xf32>
      %185 = vector.broadcast %184 : vector<8x1xf32> to vector<8x32xf32>
      %186 = arith.subf %174, %185 : vector<8x32xf32>
      %187 = arith.mulf %186, %186 : vector<8x32xf32>
      %cst_81 = arith.constant dense<0.000000e+00> : vector<8xf32>
      %188 = vector.multi_reduction <add>, %187, %cst_81 [1] : vector<8x32xf32> to vector<8xf32>
      %189 = vector.shape_cast %188 : vector<8xf32> to vector<8x1xf32>
      %cst_82 = arith.constant 3.200000e+01 : f32
      %190 = vector.broadcast %cst_82 : f32 to vector<8x1xf32>
      %191 = arith.divf %189, %190 : vector<8x1xf32>
      %192 = vector.broadcast %184 : vector<8x1xf32> to vector<8x32xf32>
      %193 = arith.subf %174, %192 : vector<8x32xf32>
      %cst_83 = arith.constant 9.99999974E-6 : f32
      %194 = vector.broadcast %cst_83 : f32 to vector<8x1xf32>
      %195 = arith.addf %191, %194 : vector<8x1xf32>
      %196 = math.rsqrt %195 : vector<8x1xf32>
      %197 = vector.broadcast %196 : vector<8x1xf32> to vector<8x32xf32>
      %198 = arith.mulf %193, %197 : vector<8x32xf32>
      %199 = vector.broadcast %179 : vector<1x32xf32> to vector<8x32xf32>
      %200 = arith.mulf %198, %199 : vector<8x32xf32>
      %201 = vector.broadcast %180 : vector<1x32xf32> to vector<8x32xf32>
      %202 = arith.addf %200, %201 : vector<8x32xf32>
      %c0_84 = arith.constant 0 : index
      %c0_85 = arith.constant 0 : index
      %203 = vector.load %arg18[%c0_84, %c0_85] : memref<8x32xf32, #tpu.memory_space<vmem>>, vector<8x32xf32>
      tpu.vector_store %arg18[%c0_84, %c0_85], %202 {strides = array<i32>} : memref<8x32xf32, #tpu.memory_space<vmem>>, vector<8x32xf32>,
    } else {
    }
    return
  }
  func.func @transform_0(%arg0: i32, %arg1: i32) -> (i32, i32) {
    %c0_i32 = arith.constant 0 : i32
    %c0_i32_0 = arith.constant 0 : i32
    return %arg0, %c0_i32 : i32, i32
  }
  func.func @transform_1(%arg0: i32, %arg1: i32) -> (i32, i32, i32) {
    %c0_i32 = arith.constant 0 : i32
    %c0_i32_0 = arith.constant 0 : i32
    %c0_i32_1 = arith.constant 0 : i32
    return %arg0, %c0_i32, %c0_i32_0 : i32, i32, i32
  }
  func.func @transform_2(%arg0: i32, %arg1: i32) -> (i32, i32, i32) {
    %c0_i32 = arith.constant 0 : i32
    %c0_i32_0 = arith.constant 0 : i32
    %c0_i32_1 = arith.constant 0 : i32
    return %arg1, %c0_i32, %c0_i32_0 : i32, i32, i32
  }
  func.func @transform_3(%arg0: i32, %arg1: i32) -> (i32, i32, i32) {
    %c0_i32 = arith.constant 0 : i32
    %c0_i32_0 = arith.constant 0 : i32
    %c0_i32_1 = arith.constant 0 : i32
    return %arg1, %c0_i32, %c0_i32_0 : i32, i32, i32
  }
  func.func @transform_4(%arg0: i32, %arg1: i32) -> (i32, i32, i32) {
    %c0_i32 = arith.constant 0 : i32
    %c0_i32_0 = arith.constant 0 : i32
    %c0_i32_1 = arith.constant 0 : i32
    return %arg1, %c0_i32, %c0_i32_0 : i32, i32, i32
  }
  func.func @transform_5(%arg0: i32, %arg1: i32) -> (i32, i32, i32) {
    %c0_i32 = arith.constant 0 : i32
    %c0_i32_0 = arith.constant 0 : i32
    %c0_i32_1 = arith.constant 0 : i32
    return %arg1, %c0_i32, %c0_i32_0 : i32, i32, i32
  }
  func.func @transform_6(%arg0: i32, %arg1: i32) -> (i32, i32, i32) {
    %c0_i32 = arith.constant 0 : i32
    %c0_i32_0 = arith.constant 0 : i32
    %c0_i32_1 = arith.constant 0 : i32
    return %arg1, %c0_i32, %c0_i32_0 : i32, i32, i32
  }
  func.func @transform_7(%arg0: i32, %arg1: i32) -> (i32, i32, i32) {
    %c0_i32 = arith.constant 0 : i32
    %c0_i32_0 = arith.constant 0 : i32
    %c0_i32_1 = arith.constant 0 : i32
    return %arg1, %c0_i32, %c0_i32_0 : i32, i32, i32
  }
  func.func @transform_8(%arg0: i32, %arg1: i32) -> (i32, i32, i32) {
    %c0_i32 = arith.constant 0 : i32
    %c0_i32_0 = arith.constant 0 : i32
    %c0_i32_1 = arith.constant 0 : i32
    return %arg1, %c0_i32, %c0_i32_0 : i32, i32, i32
  }
  func.func @transform_9(%arg0: i32, %arg1: i32) -> (i32, i32, i32) {
    %c0_i32 = arith.constant 0 : i32
    %c0_i32_0 = arith.constant 0 : i32
    %c0_i32_1 = arith.constant 0 : i32
    return %arg1, %c0_i32, %c0_i32_0 : i32, i32, i32
  }
  func.func @transform_10(%arg0: i32, %arg1: i32) -> (i32, i32, i32) {
    %c0_i32 = arith.constant 0 : i32
    %c0_i32_0 = arith.constant 0 : i32
    %c0_i32_1 = arith.constant 0 : i32
    return %arg1, %c0_i32, %c0_i32_0 : i32, i32, i32
  }
  func.func @transform_11(%arg0: i32, %arg1: i32) -> (i32, i32, i32) {
    %c0_i32 = arith.constant 0 : i32
    %c0_i32_0 = arith.constant 0 : i32
    %c0_i32_1 = arith.constant 0 : i32
    return %arg1, %c0_i32, %c0_i32_0 : i32, i32, i32
  }
  func.func @transform_12(%arg0: i32, %arg1: i32) -> (i32, i32, i32) {
    %c0_i32 = arith.constant 0 : i32
    %c0_i32_0 = arith.constant 0 : i32
    %c0_i32_1 = arith.constant 0 : i32
    return %arg1, %c0_i32, %c0_i32_0 : i32, i32, i32
  }
  func.func @transform_13(%arg0: i32, %arg1: i32) -> (i32, i32, i32) {
    %c0_i32 = arith.constant 0 : i32
    %c0_i32_0 = arith.constant 0 : i32
    %c0_i32_1 = arith.constant 0 : i32
    return %arg1, %c0_i32, %c0_i32_0 : i32, i32, i32
  }
  func.func @transform_14(%arg0: i32, %arg1: i32) -> (i32, i32) {
    %c0_i32 = arith.constant 0 : i32
    %c0_i32_0 = arith.constant 0 : i32
    %c0_i32_1 = arith.constant 0 : i32
    return %c0_i32, %c0_i32_0 : i32, i32
  }
  func.func @transform_15(%arg0: i32, %arg1: i32) -> (i32, i32) {
    %c0_i32 = arith.constant 0 : i32
    %c0_i32_0 = arith.constant 0 : i32
    %c0_i32_1 = arith.constant 0 : i32
    return %c0_i32, %c0_i32_0 : i32, i32
  }
  func.func @transform_16(%arg0: i32, %arg1: i32) -> (i32, i32) {
    %c0_i32 = arith.constant 0 : i32
    %c0_i32_0 = arith.constant 0 : i32
    return %arg0, %c0_i32 : i32, i32
  }
}

</mosaic_0001>

<llo_original>
// kernel: encoder_forward.1
$region0: #{encoder_forward.1}
  #allocation0 [shape = 'u32[]', space=smem, size = 0x4, offset = 0x4, fixed_abs, tag = 'smem constant byte address 0x4 - core index']
  #allocation1 [shape = 'u32[144,128]{1,0:T(1,128)}', space=vmem, size = 0x12000, scoped, tag = 'internal scratch']
  #allocation2 [shape = 'f32[8,32]{1,0:T(8,128)}', space=vmem, size = 0x1000, scoped, tag = 'scratch operand']
  %s0 = inlined_call_operand.vmem [shape: f32[16,32], index: 0, kind: input, shape index: {}]
  %s1 = inlined_call_operand.vmem [shape: f32[2,1,8], index: 1, kind: input, shape index: {}]
  %s2 = inlined_call_operand.vmem [shape: f32[2,1,32], index: 2, kind: input, shape index: {}]
  %s3 = inlined_call_operand.vmem [shape: f32[2,1,32], index: 3, kind: input, shape index: {}]
  %s4 = inlined_call_operand.vmem [shape: f32[2,32,96], index: 4, kind: input, shape index: {}]
  %s5 = inlined_call_operand.vmem [shape: f32[2,1,96], index: 5, kind: input, shape index: {}]
  %s6 = inlined_call_operand.vmem [shape: f32[2,32,32], index: 6, kind: input, shape index: {}]
  %s7 = inlined_call_operand.vmem [shape: f32[2,1,32], index: 7, kind: input, shape index: {}]
  %s8 = inlined_call_operand.vmem [shape: f32[2,1,32], index: 8, kind: input, shape index: {}]
  %s9 = inlined_call_operand.vmem [shape: f32[2,1,32], index: 9, kind: input, shape index: {}]
  %s10 = inlined_call_operand.vmem [shape: f32[2,32,64], index: 10, kind: input, shape index: {}]
  %s11 = inlined_call_operand.vmem [shape: f32[2,1,64], index: 11, kind: input, shape index: {}]
  %s12 = inlined_call_operand.vmem [shape: f32[2,64,32], index: 12, kind: input, shape index: {}]
  %s13 = inlined_call_operand.vmem [shape: f32[2,1,32], index: 13, kind: input, shape index: {}]
  %s14 = inlined_call_operand.vmem [shape: f32[1,32], index: 14, kind: input, shape index: {}]
  %s15 = inlined_call_operand.vmem [shape: f32[1,32], index: 15, kind: input, shape index: {}]
  %s16 = inlined_call_operand.hbm [shape: f32[16,32], index: 16, kind: output, shape index: {}]
  %s17 = sld [smem:[#allocation0]]
  $region105: #{encoder_forward.1} parent=0
    _
  %s19 = ssub.s32 1, %s17
  %s20 = scalar_select 0, %s19, %s17
  $region1: #{encoder_forward.1} parent=0
    #allocation3 [shape = 'u8[8192]{0}', space=vmem, size = 0x2000, scoped, tag = 'output window, operand 0']
    #allocation4 [shape = 's32[2]{0}', space=sflag, size = 0x8, scoped, tag = 'scoped memory for encoder_forward.1']
    %21 = vsyncpa [#allocation4], 0
    %s22 = scalar_lea.sflag [#allocation4], 1
    %23 = vsyncpa %s22, 0
    loop: start=0, step=1, limit=6
    $region2: #{encoder_forward.1} parent=1 // loop_pre_header
      _
    $region3: #{encoder_forward.1} parent=1 // loop_header
      %s25 = sphi 0, %s29
      %p26 = scmp.ge.s32.totalorder %s25, 6
      %s32 = sphi 0, %s44
      %s33 = sphi 0, %s40
      %s34 = sphi 0, %s32
      %s35 = sphi 0, %s33
      %s36 = sphi 0, %s34
      %s37 = sphi 0, %s35
      %s47 = sphi 0, %s49
      %s50 = sphi 0, %s47
      %s51 = sphi 0, %s50
      %s67 = sphi 0, %s51
      %s73 = sphi 0, %s75
      %s76 = sphi 0, %s73
      %s77 = sphi 0, %s76
      %s93 = sphi 0, %s77
      %s99 = sphi 0, %s101
      %s102 = sphi 0, %s99
      %s103 = sphi 0, %s102
      %s119 = sphi 0, %s103
      %s125 = sphi 0, %s127
      %s128 = sphi 0, %s125
      %s129 = sphi 0, %s128
      %s145 = sphi 0, %s129
      %s151 = sphi 0, %s153
      %s154 = sphi 0, %s151
      %s155 = sphi 0, %s154
      %s171 = sphi 0, %s155
      %s177 = sphi 0, %s179
      %s180 = sphi 0, %s177
      %s181 = sphi 0, %s180
      %s197 = sphi 0, %s181
      %s203 = sphi 0, %s205
      %s206 = sphi 0, %s203
      %s207 = sphi 0, %s206
      %s223 = sphi 0, %s207
      %s229 = sphi 0, %s231
      %s232 = sphi 0, %s229
      %s233 = sphi 0, %s232
      %s249 = sphi 0, %s233
      %s255 = sphi 0, %s257
      %s258 = sphi 0, %s255
      %s259 = sphi 0, %s258
      %s275 = sphi 0, %s259
      %s281 = sphi 0, %s283
      %s284 = sphi 0, %s281
      %s285 = sphi 0, %s284
      %s301 = sphi 0, %s285
      %s307 = sphi 0, %s309
      %s310 = sphi 0, %s307
      %s311 = sphi 0, %s310
      %s327 = sphi 0, %s311
      %s333 = sphi 0, %s335
      %s336 = sphi 0, %s333
      %s337 = sphi 0, %s336
      %s353 = sphi 0, %s337
      %s359 = sphi 0, %s361
      %s362 = sphi 0, %s359
      %s363 = sphi 0, %s362
      %s379 = sphi 0, %s363
      %s385 = sphi 0, %s387
      %s388 = sphi 0, %s385
      %s389 = sphi 0, %s388
      %s405 = sphi 0, %s389
      %s409 = sphi 0, %s409
      %s411 = sphi 0, %s409
      %s412 = sphi 0, %s411
      %s426 = sphi 0, %s412
      %s430 = sphi 0, %s430
      %s432 = sphi 0, %s430
      %s433 = sphi 0, %s432
      %s447 = sphi 0, %s433
      %s453 = sphi 0, %s455
      %s456 = sphi 0, %s453
      %s457 = sphi 0, %s456
      %s473 = sphi 0, %s457
    $region4: #{encoder_forward.1} parent=1 // loop_header_branch
      %28 = sbr.rel (%p26) target = $region8
    $region5: #{encoder_forward.1} parent=1 // loop_body
      %s30 = ssub.s32 %s25, 1
      %s31 = ssub.s32 %s25, 2
      %s38 = sadd.s32 1, %s33
      %p39 = scmp.ge.s32.totalorder %s38, 2
      %s40 = scalar_select %p39, 0, %s38
      %s41 = sadd.s32 1, %s32
      %s42 = scalar_select %p39, %s41, %s32
      %p43 = scmp.ge.s32.totalorder %s42, 2
      %s44 = scalar_select %p43, 0, %s42
      %s45 = ssub.s32 %s32, %s44
      %p46 = scmp.eq.s32.totalorder %s45, 0
      %s48 = sadd.s32 %s47, 1
      %s49 = scalar_select %p46, %s47, %s48
      %p52 = pneg %p46
      %p53 = scmp.eq.s32.totalorder %s25, 3
      %p54 = por %p52, %p53
      %p55 = scmp.ne.s32.totalorder %s47, %s50
      %p56 = scmp.eq.s32.totalorder %s25, 0
      %p57 = por %p55, %p56
      %p58 = scmp.ne.s32.totalorder %s47, %s50
      %p59 = scmp.eq.s32.totalorder %s30, 3
      %p60 = por %p58, %p59
      %p61 = scmp.ne.s32.totalorder %s50, %s51
      %p62 = scmp.eq.s32.totalorder %s30, 0
      %p63 = por %p61, %p62
      %p64 = scmp.ne.s32.totalorder %s50, %s51
      %p65 = scmp.eq.s32.totalorder %s31, 3
      %p66 = por %p64, %p65
      %p68 = scmp.ne.s32.totalorder %s51, %s67
      %p69 = scmp.eq.s32.totalorder %s31, 0
      %p70 = por %p68, %p69
      %s71 = ssub.s32 %s32, %s44
      %p72 = scmp.eq.s32.totalorder %s71, 0
      %s74 = sadd.s32 %s73, 1
      %s75 = scalar_select %p72, %s73, %s74
      %p78 = pneg %p72
      %p79 = scmp.eq.s32.totalorder %s25, 3
      %p80 = por %p78, %p79
      %p81 = scmp.ne.s32.totalorder %s73, %s76
      %p82 = scmp.eq.s32.totalorder %s25, 0
      %p83 = por %p81, %p82
      %p84 = scmp.ne.s32.totalorder %s73, %s76
      %p85 = scmp.eq.s32.totalorder %s30, 3
      %p86 = por %p84, %p85
      %p87 = scmp.ne.s32.totalorder %s76, %s77
      %p88 = scmp.eq.s32.totalorder %s30, 0
      %p89 = por %p87, %p88
      %p90 = scmp.ne.s32.totalorder %s76, %s77
      %p91 = scmp.eq.s32.totalorder %s31, 3
      %p92 = por %p90, %p91
      %p94 = scmp.ne.s32.totalorder %s77, %s93
      %p95 = scmp.eq.s32.totalorder %s31, 0
      %p96 = por %p94, %p95
      %s97 = ssub.s32 %s33, %s40
      %p98 = scmp.eq.s32.totalorder %s97, 0
      %s100 = sadd.s32 %s99, 1
      %s101 = scalar_select %p98, %s99, %s100
      %p104 = pneg %p98
      %p105 = scmp.eq.s32.totalorder %s25, 3
      %p106 = por %p104, %p105
      %p107 = scmp.ne.s32.totalorder %s99, %s102
      %p108 = scmp.eq.s32.totalorder %s25, 0
      %p109 = por %p107, %p108
      %p110 = scmp.ne.s32.totalorder %s99, %s102
      %p111 = scmp.eq.s32.totalorder %s30, 3
      %p112 = por %p110, %p111
      %p113 = scmp.ne.s32.totalorder %s102, %s103
      %p114 = scmp.eq.s32.totalorder %s30, 0
      %p115 = por %p113, %p114
      %p116 = scmp.ne.s32.totalorder %s102, %s103
      %p117 = scmp.eq.s32.totalorder %s31, 3
      %p118 = por %p116, %p117
      %p120 = scmp.ne.s32.totalorder %s103, %s119
      %p121 = scmp.eq.s32.totalorder %s31, 0
      %p122 = por %p120, %p121
      %s123 = ssub.s32 %s33, %s40
      %p124 = scmp.eq.s32.totalorder %s123, 0
      %s126 = sadd.s32 %s125, 1
      %s127 = scalar_select %p124, %s125, %s126
      %p130 = pneg %p124
      %p131 = scmp.eq.s32.totalorder %s25, 3
      %p132 = por %p130, %p131
      %p133 = scmp.ne.s32.totalorder %s125, %s128
      %p134 = scmp.eq.s32.totalorder %s25, 0
      %p135 = por %p133, %p134
      %p136 = scmp.ne.s32.totalorder %s125, %s128
      %p137 = scmp.eq.s32.totalorder %s30, 3
      %p138 = por %p136, %p137
      %p139 = scmp.ne.s32.totalorder %s128, %s129
      %p140 = scmp.eq.s32.totalorder %s30, 0
      %p141 = por %p139, %p140
      %p142 = scmp.ne.s32.totalorder %s128, %s129
      %p143 = scmp.eq.s32.totalorder %s31, 3
      %p144 = por %p142, %p143
      %p146 = scmp.ne.s32.totalorder %s129, %s145
      %p147 = scmp.eq.s32.totalorder %s31, 0
      %p148 = por %p146, %p147
      %s149 = ssub.s32 %s33, %s40
      %p150 = scmp.eq.s32.totalorder %s149, 0
      %s152 = sadd.s32 %s151, 1
      %s153 = scalar_select %p150, %s151, %s152
      %p156 = pneg %p150
      %p157 = scmp.eq.s32.totalorder %s25, 3
      %p158 = por %p156, %p157
      %p159 = scmp.ne.s32.totalorder %s151, %s154
      %p160 = scmp.eq.s32.totalorder %s25, 0
      %p161 = por %p159, %p160
      %p162 = scmp.ne.s32.totalorder %s151, %s154
      %p163 = scmp.eq.s32.totalorder %s30, 3
      %p164 = por %p162, %p163
      %p165 = scmp.ne.s32.totalorder %s154, %s155
      %p166 = scmp.eq.s32.totalorder %s30, 0
      %p167 = por %p165, %p166
      %p168 = scmp.ne.s32.totalorder %s154, %s155
      %p169 = scmp.eq.s32.totalorder %s31, 3
      %p170 = por %p168, %p169
      %p172 = scmp.ne.s32.totalorder %s155, %s171
      %p173 = scmp.eq.s32.totalorder %s31, 0
      %p174 = por %p172, %p173
      %s175 = ssub.s32 %s33, %s40
      %p176 = scmp.eq.s32.totalorder %s175, 0
      %s178 = sadd.s32 %s177, 1
      %s179 = scalar_select %p176, %s177, %s178
      %p182 = pneg %p176
      %p183 = scmp.eq.s32.totalorder %s25, 3
      %p184 = por %p182, %p183
      %p185 = scmp.ne.s32.totalorder %s177, %s180
      %p186 = scmp.eq.s32.totalorder %s25, 0
      %p187 = por %p185, %p186
      %p188 = scmp.ne.s32.totalorder %s177, %s180
      %p189 = scmp.eq.s32.totalorder %s30, 3
      %p190 = por %p188, %p189
      %p191 = scmp.ne.s32.totalorder %s180, %s181
      %p192 = scmp.eq.s32.totalorder %s30, 0
      %p193 = por %p191, %p192
      %p194 = scmp.ne.s32.totalorder %s180, %s181
      %p195 = scmp.eq.s32.totalorder %s31, 3
      %p196 = por %p194, %p195
      %p198 = scmp.ne.s32.totalorder %s181, %s197
      %p199 = scmp.eq.s32.totalorder %s31, 0
      %p200 = por %p198, %p199
      %s201 = ssub.s32 %s33, %s40
      %p202 = scmp.eq.s32.totalorder %s201, 0
      %s204 = sadd.s32 %s203, 1
      %s205 = scalar_select %p202, %s203, %s204
      %p208 = pneg %p202
      %p209 = scmp.eq.s32.totalorder %s25, 3
      %p210 = por %p208, %p209
      %p211 = scmp.ne.s32.totalorder %s203, %s206
      %p212 = scmp.eq.s32.totalorder %s25, 0
      %p213 = por %p211, %p212
      %p214 = scmp.ne.s32.totalorder %s203, %s206
      %p215 = scmp.eq.s32.totalorder %s30, 3
      %p216 = por %p214, %p215
      %p217 = scmp.ne.s32.totalorder %s206, %s207
      %p218 = scmp.eq.s32.totalorder %s30, 0
      %p219 = por %p217, %p218
      %p220 = scmp.ne.s32.totalorder %s206, %s207
      %p221 = scmp.eq.s32.totalorder %s31, 3
      %p222 = por %p220, %p221
      %p224 = scmp.ne.s32.totalorder %s207, %s223
      %p225 = scmp.eq.s32.totalorder %s31, 0
      %p226 = por %p224, %p225
      %s227 = ssub.s32 %s33, %s40
      %p228 = scmp.eq.s32.totalorder %s227, 0
      %s230 = sadd.s32 %s229, 1
      %s231 = scalar_select %p228, %s229, %s230
      %p234 = pneg %p228
      %p235 = scmp.eq.s32.totalorder %s25, 3
      %p236 = por %p234, %p235
      %p237 = scmp.ne.s32.totalorder %s229, %s232
      %p238 = scmp.eq.s32.totalorder %s25, 0
      %p239 = por %p237, %p238
      %p240 = scmp.ne.s32.totalorder %s229, %s232
      %p241 = scmp.eq.s32.totalorder %s30, 3
      %p242 = por %p240, %p241
      %p243 = scmp.ne.s32.totalorder %s232, %s233
      %p244 = scmp.eq.s32.totalorder %s30, 0
      %p245 = por %p243, %p244
      %p246 = scmp.ne.s32.totalorder %s232, %s233
      %p247 = scmp.eq.s32.totalorder %s31, 3
      %p248 = por %p246, %p247
      %p250 = scmp.ne.s32.totalorder %s233, %s249
      %p251 = scmp.eq.s32.totalorder %s31, 0
      %p252 = por %p250, %p251
      %s253 = ssub.s32 %s33, %s40
      %p254 = scmp.eq.s32.totalorder %s253, 0
      %s256 = sadd.s32 %s255, 1
      %s257 = scalar_select %p254, %s255, %s256
      %p260 = pneg %p254
      %p261 = scmp.eq.s32.totalorder %s25, 3
      %p262 = por %p260, %p261
      %p263 = scmp.ne.s32.totalorder %s255, %s258
      %p264 = scmp.eq.s32.totalorder %s25, 0
      %p265 = por %p263, %p264
      %p266 = scmp.ne.s32.totalorder %s255, %s258
      %p267 = scmp.eq.s32.totalorder %s30, 3
      %p268 = por %p266, %p267
      %p269 = scmp.ne.s32.totalorder %s258, %s259
      %p270 = scmp.eq.s32.totalorder %s30, 0
      %p271 = por %p269, %p270
      %p272 = scmp.ne.s32.totalorder %s258, %s259
      %p273 = scmp.eq.s32.totalorder %s31, 3
      %p274 = por %p272, %p273
      %p276 = scmp.ne.s32.totalorder %s259, %s275
      %p277 = scmp.eq.s32.totalorder %s31, 0
      %p278 = por %p276, %p277
      %s279 = ssub.s32 %s33, %s40
      %p280 = scmp.eq.s32.totalorder %s279, 0
      %s282 = sadd.s32 %s281, 1
      %s283 = scalar_select %p280, %s281, %s282
      %p286 = pneg %p280
      %p287 = scmp.eq.s32.totalorder %s25, 3
      %p288 = por %p286, %p287
      %p289 = scmp.ne.s32.totalorder %s281, %s284
      %p290 = scmp.eq.s32.totalorder %s25, 0
      %p291 = por %p289, %p290
      %p292 = scmp.ne.s32.totalorder %s281, %s284
      %p293 = scmp.eq.s32.totalorder %s30, 3
      %p294 = por %p292, %p293
      %p295 = scmp.ne.s32.totalorder %s284, %s285
      %p296 = scmp.eq.s32.totalorder %s30, 0
      %p297 = por %p295, %p296
      %p298 = scmp.ne.s32.totalorder %s284, %s285
      %p299 = scmp.eq.s32.totalorder %s31, 3
      %p300 = por %p298, %p299
      %p302 = scmp.ne.s32.totalorder %s285, %s301
      %p303 = scmp.eq.s32.totalorder %s31, 0
      %p304 = por %p302, %p303
      %s305 = ssub.s32 %s33, %s40
      %p306 = scmp.eq.s32.totalorder %s305, 0
      %s308 = sadd.s32 %s307, 1
      %s309 = scalar_select %p306, %s307, %s308
      %p312 = pneg %p306
      %p313 = scmp.eq.s32.totalorder %s25, 3
      %p314 = por %p312, %p313
      %p315 = scmp.ne.s32.totalorder %s307, %s310
      %p316 = scmp.eq.s32.totalorder %s25, 0
      %p317 = por %p315, %p316
      %p318 = scmp.ne.s32.totalorder %s307, %s310
      %p319 = scmp.eq.s32.totalorder %s30, 3
      %p320 = por %p318, %p319
      %p321 = scmp.ne.s32.totalorder %s310, %s311
      %p322 = scmp.eq.s32.totalorder %s30, 0
      %p323 = por %p321, %p322
      %p324 = scmp.ne.s32.totalorder %s310, %s311
      %p325 = scmp.eq.s32.totalorder %s31, 3
      %p326 = por %p324, %p325
      %p328 = scmp.ne.s32.totalorder %s311, %s327
      %p329 = scmp.eq.s32.totalorder %s31, 0
      %p330 = por %p328, %p329
      %s331 = ssub.s32 %s33, %s40
      %p332 = scmp.eq.s32.totalorder %s331, 0
      %s334 = sadd.s32 %s333, 1
      %s335 = scalar_select %p332, %s333, %s334
      %p338 = pneg %p332
      %p339 = scmp.eq.s32.totalorder %s25, 3
      %p340 = por %p338, %p339
      %p341 = scmp.ne.s32.totalorder %s333, %s336
      %p342 = scmp.eq.s32.totalorder %s25, 0
      %p343 = por %p341, %p342
      %p344 = scmp.ne.s32.totalorder %s333, %s336
      %p345 = scmp.eq.s32.totalorder %s30, 3
      %p346 = por %p344, %p345
      %p347 = scmp.ne.s32.totalorder %s336, %s337
      %p348 = scmp.eq.s32.totalorder %s30, 0
      %p349 = por %p347, %p348
      %p350 = scmp.ne.s32.totalorder %s336, %s337
      %p351 = scmp.eq.s32.totalorder %s31, 3
      %p352 = por %p350, %p351
      %p354 = scmp.ne.s32.totalorder %s337, %s353
      %p355 = scmp.eq.s32.totalorder %s31, 0
      %p356 = por %p354, %p355
      %s357 = ssub.s32 %s33, %s40
      %p358 = scmp.eq.s32.totalorder %s357, 0
      %s360 = sadd.s32 %s359, 1
      %s361 = scalar_select %p358, %s359, %s360
      %p364 = pneg %p358
      %p365 = scmp.eq.s32.totalorder %s25, 3
      %p366 = por %p364, %p365
      %p367 = scmp.ne.s32.totalorder %s359, %s362
      %p368 = scmp.eq.s32.totalorder %s25, 0
      %p369 = por %p367, %p368
      %p370 = scmp.ne.s32.totalorder %s359, %s362
      %p371 = scmp.eq.s32.totalorder %s30, 3
      %p372 = por %p370, %p371
      %p373 = scmp.ne.s32.totalorder %s362, %s363
      %p374 = scmp.eq.s32.totalorder %s30, 0
      %p375 = por %p373, %p374
      %p376 = scmp.ne.s32.totalorder %s362, %s363
      %p377 = scmp.eq.s32.totalorder %s31, 3
      %p378 = por %p376, %p377
      %p380 = scmp.ne.s32.totalorder %s363, %s379
      %p381 = scmp.eq.s32.totalorder %s31, 0
      %p382 = por %p380, %p381
      %s383 = ssub.s32 %s33, %s40
      %p384 = scmp.eq.s32.totalorder %s383, 0
      %s386 = sadd.s32 %s385, 1
      %s387 = scalar_select %p384, %s385, %s386
      %p390 = pneg %p384
      %p391 = scmp.eq.s32.totalorder %s25, 3
      %p392 = por %p390, %p391
      %p393 = scmp.ne.s32.totalorder %s385, %s388
      %p394 = scmp.eq.s32.totalorder %s25, 0
      %p395 = por %p393, %p394
      %p396 = scmp.ne.s32.totalorder %s385, %s388
      %p397 = scmp.eq.s32.totalorder %s30, 3
      %p398 = por %p396, %p397
      %p399 = scmp.ne.s32.totalorder %s388, %s389
      %p400 = scmp.eq.s32.totalorder %s30, 0
      %p401 = por %p399, %p400
      %p402 = scmp.ne.s32.totalorder %s388, %s389
      %p403 = scmp.eq.s32.totalorder %s31, 3
      %p404 = por %p402, %p403
      %p406 = scmp.ne.s32.totalorder %s389, %s405
      %p407 = scmp.eq.s32.totalorder %s31, 0
      %p408 = por %p406, %p407
      %s410 = sadd.s32 %s409, 1
      %p413 = scmp.eq.s32.totalorder %s25, 3
      %p414 = scmp.ne.s32.totalorder %s409, %s411
      %p415 = scmp.eq.s32.totalorder %s25, 0
      %p416 = por %p414, %p415
      %p417 = scmp.ne.s32.totalorder %s409, %s411
      %p418 = scmp.eq.s32.totalorder %s30, 3
      %p419 = por %p417, %p418
      %p420 = scmp.ne.s32.totalorder %s411, %s412
      %p421 = scmp.eq.s32.totalorder %s30, 0
      %p422 = por %p420, %p421
      %p423 = scmp.ne.s32.totalorder %s411, %s412
      %p424 = scmp.eq.s32.totalorder %s31, 3
      %p425 = por %p423, %p424
      %p427 = scmp.ne.s32.totalorder %s412, %s426
      %p428 = scmp.eq.s32.totalorder %s31, 0
      %p429 = por %p427, %p428
      %s431 = sadd.s32 %s430, 1
      %p434 = scmp.eq.s32.totalorder %s25, 3
      %p435 = scmp.ne.s32.totalorder %s430, %s432
      %p436 = scmp.eq.s32.totalorder %s25, 0
      %p437 = por %p435, %p436
      %p438 = scmp.ne.s32.totalorder %s430, %s432
      %p439 = scmp.eq.s32.totalorder %s30, 3
      %p440 = por %p438, %p439
      %p441 = scmp.ne.s32.totalorder %s432, %s433
      %p442 = scmp.eq.s32.totalorder %s30, 0
      %p443 = por %p441, %p442
      %p444 = scmp.ne.s32.totalorder %s432, %s433
      %p445 = scmp.eq.s32.totalorder %s31, 3
      %p446 = por %p444, %p445
      %p448 = scmp.ne.s32.totalorder %s433, %s447
      %p449 = scmp.eq.s32.totalorder %s31, 0
      %p450 = por %p448, %p449
      %s451 = ssub.s32 %s32, %s44
      %p452 = scmp.eq.s32.totalorder %s451, 0
      %s454 = sadd.s32 %s453, 1
      %s455 = scalar_select %p452, %s453, %s454
      %p458 = pneg %p452
      %p459 = scmp.eq.s32.totalorder %s25, 3
      %p460 = por %p458, %p459
      %p461 = scmp.ne.s32.totalorder %s453, %s456
      %p462 = scmp.eq.s32.totalorder %s25, 0
      %p463 = por %p461, %p462
      %p464 = scmp.ne.s32.totalorder %s453, %s456
      %p465 = scmp.eq.s32.totalorder %s30, 3
      %p466 = por %p464, %p465
      %p467 = scmp.ne.s32.totalorder %s456, %s457
      %p468 = scmp.eq.s32.totalorder %s30, 0
      %p469 = por %p467, %p468
      %p470 = scmp.ne.s32.totalorder %s456, %s457
      %p471 = scmp.eq.s32.totalorder %s31, 3
      %p472 = por %p470, %p471
      %p474 = scmp.ne.s32.totalorder %s457, %s473
      %p475 = scmp.eq.s32.totalorder %s31, 0
      %p476 = por %p474, %p475
      %p477 = scmp.le.s32.totalorder 1, %s25
      %p478 = scmp.lt.s32.totalorder %s25, 5
      %p479 = pnand %p477, %p478
      %p480 = pneg %p479
      // Predicated region
      $region9: #{encoder_forward.1} parent=5 // pred_check
        _
      $region10: #{encoder_forward.1} parent=5 // pred_check_branch
        %482 = sbr.rel (%p479) target = $region12
      $region11: #{encoder_forward.1} parent=5 // pred_region
        %s483 = ssub.s32 %s25, 1
        // Predicated region
        $region13: #{encoder_forward.1} parent=11 // pred_check
          %p484 = pneg %p422
        $region14: #{encoder_forward.1} parent=11 // pred_check_branch
          %486 = sbr.rel (%p484) target = $region16
        $region15: #{encoder_forward.1} parent=11 // pred_region
          _
        $region16: #{encoder_forward.1} parent=11 // pred_fallthru
          _
        // Predicated region
        $region17: #{encoder_forward.1} parent=11 // pred_check
          %p487 = pneg %p443
        $region18: #{encoder_forward.1} parent=11 // pred_check_branch
          %489 = sbr.rel (%p487) target = $region20
        $region19: #{encoder_forward.1} parent=11 // pred_region
          _
        $region20: #{encoder_forward.1} parent=11 // pred_fallthru
          _
      $region12: #{encoder_forward.1} parent=5 // pred_fallthru
        _
      %p490 = scmp.lt.s32.totalorder %s25, 4
      // Predicated region
      $region21: #{encoder_forward.1} parent=5 // pred_check
        %p491 = pneg %p490
      $region22: #{encoder_forward.1} parent=5 // pred_check_branch
        %493 = sbr.rel (%p491) target = $region24
      $region23: #{encoder_forward.1} parent=5 // pred_region
        // Predicated region
        $region25: #{encoder_forward.1} parent=23 // pred_check
          %p494 = pneg %p57
        $region26: #{encoder_forward.1} parent=23 // pred_check_branch
          %496 = sbr.rel (%p494) target = $region28
        $region27: #{encoder_forward.1} parent=23 // pred_region
          %p497 = scmp.lt.s32.totalorder %s32, 1
          %s498 = scalar_select %p497, %s32, 1
          %s499 = smul.addr %s498, 8
          %s500 = scalar_lea.vmem %s0, %s499
        $region28: #{encoder_forward.1} parent=23 // pred_fallthru
          _
        // Predicated region
        $region29: #{encoder_forward.1} parent=23 // pred_check
          %p501 = pneg %p83
        $region30: #{encoder_forward.1} parent=23 // pred_check_branch
          %503 = sbr.rel (%p501) target = $region32
        $region31: #{encoder_forward.1} parent=23 // pred_region
          %p504 = scmp.lt.s32.totalorder %s32, 1
          %s505 = scalar_select %p504, %s32, 1
          %s506 = scalar_lea.vmem %s1, %s505
        $region32: #{encoder_forward.1} parent=23 // pred_fallthru
          _
        // Predicated region
        $region33: #{encoder_forward.1} parent=23 // pred_check
          %p507 = pneg %p109
        $region34: #{encoder_forward.1} parent=23 // pred_check_branch
          %509 = sbr.rel (%p507) target = $region36
        $region35: #{encoder_forward.1} parent=23 // pred_region
          %p510 = scmp.lt.s32.totalorder %s33, 1
          %s511 = scalar_select %p510, %s33, 1
          %s512 = scalar_lea.vmem %s2, %s511
        $region36: #{encoder_forward.1} parent=23 // pred_fallthru
          _
        // Predicated region
        $region37: #{encoder_forward.1} parent=23 // pred_check
          %p513 = pneg %p135
        $region38: #{encoder_forward.1} parent=23 // pred_check_branch
          %515 = sbr.rel (%p513) target = $region40
        $region39: #{encoder_forward.1} parent=23 // pred_region
          %p516 = scmp.lt.s32.totalorder %s33, 1
          %s517 = scalar_select %p516, %s33, 1
          %s518 = scalar_lea.vmem %s3, %s517
        $region40: #{encoder_forward.1} parent=23 // pred_fallthru
          _
        // Predicated region
        $region41: #{encoder_forward.1} parent=23 // pred_check
          %p519 = pneg %p161
        $region42: #{encoder_forward.1} parent=23 // pred_check_branch
          %521 = sbr.rel (%p519) target = $region44
        $region43: #{encoder_forward.1} parent=23 // pred_region
          %p522 = scmp.lt.s32.totalorder %s33, 1
          %s523 = scalar_select %p522, %s33, 1
          %s524 = smul.addr %s523, 4
          %s525 = smul.addr %s524, 8
          %s526 = scalar_lea.vmem %s4, %s525
        $region44: #{encoder_forward.1} parent=23 // pred_fallthru
          _
        // Predicated region
        $region45: #{encoder_forward.1} parent=23 // pred_check
          %p527 = pneg %p187
        $region46: #{encoder_forward.1} parent=23 // pred_check_branch
          %529 = sbr.rel (%p527) target = $region48
        $region47: #{encoder_forward.1} parent=23 // pred_region
          %p530 = scmp.lt.s32.totalorder %s33, 1
          %s531 = scalar_select %p530, %s33, 1
          %s532 = scalar_lea.vmem %s5, %s531
        $region48: #{encoder_forward.1} parent=23 // pred_fallthru
          _
        // Predicated region
        $region49: #{encoder_forward.1} parent=23 // pred_check
          %p533 = pneg %p213
        $region50: #{encoder_forward.1} parent=23 // pred_check_branch
          %535 = sbr.rel (%p533) target = $region52
        $region51: #{encoder_forward.1} parent=23 // pred_region
          %p536 = scmp.lt.s32.totalorder %s33, 1
          %s537 = scalar_select %p536, %s33, 1
          %s538 = smul.addr %s537, 4
          %s539 = smul.addr %s538, 8
          %s540 = scalar_lea.vmem %s6, %s539
        $region52: #{encoder_forward.1} parent=23 // pred_fallthru
          _
        // Predicated region
        $region53: #{encoder_forward.1} parent=23 // pred_check
          %p541 = pneg %p239
        $region54: #{encoder_forward.1} parent=23 // pred_check_branch
          %543 = sbr.rel (%p541) target = $region56
        $region55: #{encoder_forward.1} parent=23 // pred_region
          %p544 = scmp.lt.s32.totalorder %s33, 1
          %s545 = scalar_select %p544, %s33, 1
          %s546 = scalar_lea.vmem %s7, %s545
        $region56: #{encoder_forward.1} parent=23 // pred_fallthru
          _
        // Predicated region
        $region57: #{encoder_forward.1} parent=23 // pred_check
          %p547 = pneg %p265
        $region58: #{encoder_forward.1} parent=23 // pred_check_branch
          %549 = sbr.rel (%p547) target = $region60
        $region59: #{encoder_forward.1} parent=23 // pred_region
          %p550 = scmp.lt.s32.totalorder %s33, 1
          %s551 = scalar_select %p550, %s33, 1
          %s552 = scalar_lea.vmem %s8, %s551
        $region60: #{encoder_forward.1} parent=23 // pred_fallthru
          _
        // Predicated region
        $region61: #{encoder_forward.1} parent=23 // pred_check
          %p553 = pneg %p291
        $region62: #{encoder_forward.1} parent=23 // pred_check_branch
          %555 = sbr.rel (%p553) target = $region64
        $region63: #{encoder_forward.1} parent=23 // pred_region
          %p556 = scmp.lt.s32.totalorder %s33, 1
          %s557 = scalar_select %p556, %s33, 1
          %s558 = scalar_lea.vmem %s9, %s557
        $region64: #{encoder_forward.1} parent=23 // pred_fallthru
          _
        // Predicated region
        $region65: #{encoder_forward.1} parent=23 // pred_check
          %p559 = pneg %p317
        $region66: #{encoder_forward.1} parent=23 // pred_check_branch
          %561 = sbr.rel (%p559) target = $region68
        $region67: #{encoder_forward.1} parent=23 // pred_region
          %p562 = scmp.lt.s32.totalorder %s33, 1
          %s563 = scalar_select %p562, %s33, 1
          %s564 = smul.addr %s563, 4
          %s565 = smul.addr %s564, 8
          %s566 = scalar_lea.vmem %s10, %s565
        $region68: #{encoder_forward.1} parent=23 // pred_fallthru
          _
        // Predicated region
        $region69: #{encoder_forward.1} parent=23 // pred_check
          %p567 = pneg %p343
        $region70: #{encoder_forward.1} parent=23 // pred_check_branch
          %569 = sbr.rel (%p567) target = $region72
        $region71: #{encoder_forward.1} parent=23 // pred_region
          %p570 = scmp.lt.s32.totalorder %s33, 1
          %s571 = scalar_select %p570, %s33, 1
          %s572 = scalar_lea.vmem %s11, %s571
        $region72: #{encoder_forward.1} parent=23 // pred_fallthru
          _
        // Predicated region
        $region73: #{encoder_forward.1} parent=23 // pred_check
          %p573 = pneg %p369
        $region74: #{encoder_forward.1} parent=23 // pred_check_branch
          %575 = sbr.rel (%p573) target = $region76
        $region75: #{encoder_forward.1} parent=23 // pred_region
          %p576 = scmp.lt.s32.totalorder %s33, 1
          %s577 = scalar_select %p576, %s33, 1
          %s578 = smul.addr %s577, 8
          %s579 = smul.addr %s578, 8
          %s580 = scalar_lea.vmem %s12, %s579
        $region76: #{encoder_forward.1} parent=23 // pred_fallthru
          _
        // Predicated region
        $region77: #{encoder_forward.1} parent=23 // pred_check
          %p581 = pneg %p395
        $region78: #{encoder_forward.1} parent=23 // pred_check_branch
          %583 = sbr.rel (%p581) target = $region80
        $region79: #{encoder_forward.1} parent=23 // pred_region
          %p584 = scmp.lt.s32.totalorder %s33, 1
          %s585 = scalar_select %p584, %s33, 1
          %s586 = scalar_lea.vmem %s13, %s585
        $region80: #{encoder_forward.1} parent=23 // pred_fallthru
          _
      $region24: #{encoder_forward.1} parent=5 // pred_fallthru
        _
      %p587 = scmp.le.s32.totalorder 1, %s25
      %p588 = scmp.lt.s32.totalorder %s25, 5
      %p589 = pnand %p587, %p588
      %p590 = pneg %p589
      // Predicated region
      $region81: #{encoder_forward.1} parent=5 // pred_check
        _
      $region82: #{encoder_forward.1} parent=5 // pred_check_branch
        %592 = sbr.rel (%p589) target = $region84
      $region83: #{encoder_forward.1} parent=5 // pred_region
        %s593 = ssub.s32 %s25, 1
        %p594 = scmp.lt.s32.totalorder %s34, 1
        %s595 = scalar_select %p594, %s34, 1
        %s596 = smul.addr %s595, 8
        %s597 = scalar_lea.vmem %s0, %s596
        %p598 = pneg %p63
        %p599 = pneg %p60
        %p600 = scmp.lt.s32.totalorder %s34, 1
        %s601 = scalar_select %p600, %s34, 1
        %s602 = scalar_lea.vmem %s1, %s601
        %p603 = pneg %p89
        %p604 = pneg %p86
        %p605 = scmp.lt.s32.totalorder %s35, 1
        %s606 = scalar_select %p605, %s35, 1
        %s607 = scalar_lea.vmem %s2, %s606
        %p608 = pneg %p115
        %p609 = pneg %p112
        %p610 = scmp.lt.s32.totalorder %s35, 1
        %s611 = scalar_select %p610, %s35, 1
        %s612 = scalar_lea.vmem %s3, %s611
        %p613 = pneg %p141
        %p614 = pneg %p138
        %p615 = scmp.lt.s32.totalorder %s35, 1
        %s616 = scalar_select %p615, %s35, 1
        %s617 = smul.addr %s616, 4
        %s618 = smul.addr %s617, 8
        %s619 = scalar_lea.vmem %s4, %s618
        %p620 = pneg %p167
        %p621 = pneg %p164
        %p622 = scmp.lt.s32.totalorder %s35, 1
        %s623 = scalar_select %p622, %s35, 1
        %s624 = scalar_lea.vmem %s5, %s623
        %p625 = pneg %p193
        %p626 = pneg %p190
        %p627 = scmp.lt.s32.totalorder %s35, 1
        %s628 = scalar_select %p627, %s35, 1
        %s629 = smul.addr %s628, 4
        %s630 = smul.addr %s629, 8
        %s631 = scalar_lea.vmem %s6, %s630
        %p632 = pneg %p219
        %p633 = pneg %p216
        %p634 = scmp.lt.s32.totalorder %s35, 1
        %s635 = scalar_select %p634, %s35, 1
        %s636 = scalar_lea.vmem %s7, %s635
        %p637 = pneg %p245
        %p638 = pneg %p242
        %p639 = scmp.lt.s32.totalorder %s35, 1
        %s640 = scalar_select %p639, %s35, 1
        %s641 = scalar_lea.vmem %s8, %s640
        %p642 = pneg %p271
        %p643 = pneg %p268
        %p644 = scmp.lt.s32.totalorder %s35, 1
        %s645 = scalar_select %p644, %s35, 1
        %s646 = scalar_lea.vmem %s9, %s645
        %p647 = pneg %p297
        %p648 = pneg %p294
        %p649 = scmp.lt.s32.totalorder %s35, 1
        %s650 = scalar_select %p649, %s35, 1
        %s651 = smul.addr %s650, 4
        %s652 = smul.addr %s651, 8
        %s653 = scalar_lea.vmem %s10, %s652
        %p654 = pneg %p323
        %p655 = pneg %p320
        %p656 = scmp.lt.s32.totalorder %s35, 1
        %s657 = scalar_select %p656, %s35, 1
        %s658 = scalar_lea.vmem %s11, %s657
        %p659 = pneg %p349
        %p660 = pneg %p346
        %p661 = scmp.lt.s32.totalorder %s35, 1
        %s662 = scalar_select %p661, %s35, 1
        %s663 = smul.addr %s662, 8
        %s664 = smul.addr %s663, 8
        %s665 = scalar_lea.vmem %s12, %s664
        %p666 = pneg %p375
        %p667 = pneg %p372
        %p668 = scmp.lt.s32.totalorder %s35, 1
        %s669 = scalar_select %p668, %s35, 1
        %s670 = scalar_lea.vmem %s13, %s669
        %p671 = pneg %p401
        %p672 = pneg %p398
        %p673 = pneg %p422
        %p674 = pneg %p419
        %p675 = pneg %p443
        %p676 = pneg %p440
        %p677 = pneg %p469
        %p678 = pneg %p466
        %s679 = sand.u32 %s456, 1
        %s680 = scalar_lea.sflag [#allocation4], %s679
        %s681 = sand.u32 %s456, 1
        %s682 = smul.addr %s681, 8
        %s683 = scalar_lea.vmem [#allocation3], %s682
        %p684 = scmp.lt.s32.totalorder %s34, 1
        %s685 = scalar_select %p684, %s34, 1
        %s686 = smul.addr %s685, 8
        %s687 = scalar_lea.vmem %s0, %s686
        %p688 = scmp.lt.s32.totalorder %s34, 1
        %s689 = scalar_select %p688, %s34, 1
        %s690 = scalar_lea.vmem %s1, %s689
        %p691 = scmp.lt.s32.totalorder %s35, 1
        %s692 = scalar_select %p691, %s35, 1
        %s693 = scalar_lea.vmem %s2, %s692
        %p694 = scmp.lt.s32.totalorder %s35, 1
        %s695 = scalar_select %p694, %s35, 1
        %s696 = scalar_lea.vmem %s3, %s695
        %p697 = scmp.lt.s32.totalorder %s35, 1
        %s698 = scalar_select %p697, %s35, 1
        %s699 = smul.addr %s698, 4
        %s700 = smul.addr %s699, 8
        %s701 = scalar_lea.vmem %s4, %s700
        %p702 = scmp.lt.s32.totalorder %s35, 1
        %s703 = scalar_select %p702, %s35, 1
        %s704 = scalar_lea.vmem %s5, %s703
        %p705 = scmp.lt.s32.totalorder %s35, 1
        %s706 = scalar_select %p705, %s35, 1
        %s707 = smul.addr %s706, 4
        %s708 = smul.addr %s707, 8
        %s709 = scalar_lea.vmem %s6, %s708
        %p710 = scmp.lt.s32.totalorder %s35, 1
        %s711 = scalar_select %p710, %s35, 1
        %s712 = scalar_lea.vmem %s7, %s711
        %p713 = scmp.lt.s32.totalorder %s35, 1
        %s714 = scalar_select %p713, %s35, 1
        %s715 = scalar_lea.vmem %s8, %s714
        %p716 = scmp.lt.s32.totalorder %s35, 1
        %s717 = scalar_select %p716, %s35, 1
        %s718 = scalar_lea.vmem %s9, %s717
        %p719 = scmp.lt.s32.totalorder %s35, 1
        %s720 = scalar_select %p719, %s35, 1
        %s721 = smul.addr %s720, 4
        %s722 = smul.addr %s721, 8
        %s723 = scalar_lea.vmem %s10, %s722
        %p724 = scmp.lt.s32.totalorder %s35, 1
        %s725 = scalar_select %p724, %s35, 1
        %s726 = scalar_lea.vmem %s11, %s725
        %p727 = scmp.lt.s32.totalorder %s35, 1
        %s728 = scalar_select %p727, %s35, 1
        %s729 = smul.addr %s728, 8
        %s730 = smul.addr %s729, 8
        %s731 = scalar_lea.vmem %s12, %s730
        %p732 = scmp.lt.s32.totalorder %s35, 1
        %s733 = scalar_select %p732, %s35, 1
        %s734 = scalar_lea.vmem %s13, %s733
        %p735 = scmp.eq.s32.totalorder %s35, 0
        // Predicated region
        $region85: #{encoder_forward.1} parent=83 // pred_check
          %p736 = pneg %p735
        $region86: #{encoder_forward.1} parent=83 // pred_check_branch
          %738 = sbr.rel (%p736) target = $region88
        $region87: #{encoder_forward.1} parent=83 // pred_region
          %v739 = vld [vmem:[%s687] sm:$0xff]
          %vm740 = vcmask 261120
          %741 = vst.msk [vmem:[#allocation2] sm:$0xff] %vm740, %v739
        $region88: #{encoder_forward.1} parent=83 // pred_fallthru
          _
        %v742 = vld [vmem:[#allocation2] sm:$0xff]
        %v743 = vld [vmem:[%s693] sm:$0x1]
        %v744 = vld [vmem:[%s696] sm:$0x1]
        %vm745 = vcmask 261120
        %v746 = vsel %vm745, %v742, 0.0
        %747 = vadd.xlane.f32.xlu0 %v746
        %v748 = vpop.xlane.xlu0 %747
        %v749 = vrcp.pop 32.0
        %v750 = vmul.f32 %v748, %v749
        %v751 = vsub.f32 %v742, %v750
        %v752 = vmul.f32 %v751, %v751
        %v753 = vsel %vm745, %v752, 0.0
        %754 = vadd.xlane.f32.xlu0 %v753
        %v755 = vpop.xlane.xlu0 %754
        %v756 = vmul.f32 %v755, %v749
        %v757 = vadd.f32 %v756, 1e-05
        %v758 = vrsqrt.pop %v757
        %v759 = vmul.f32 %v751, %v758
        %v761 = vlaneseq
        %v762 = vshrl.u32 %v761, 7
        %v763 = vsub.s32 0, %v762
        %v764 = vrot.slane %v743, %v763
        %v766 = vmul.f32 %v759, %v764
        %v768 = vlaneseq
        %v769 = vshrl.u32 %v768, 7
        %v770 = vsub.s32 0, %v769
        %v771 = vrot.slane %v744, %v770
        %v773 = vadd.f32 %v766, %v771
        %v774 = vld [vmem:[%s701] sm:$0xff]
        %v775 = vld [vmem:[%s701 + $0x8] sm:$0xff]
        %v776 = vld [vmem:[%s701 + $0x10] sm:$0xff]
        %v777 = vld [vmem:[%s701 + $0x18] sm:$0xff]
        %v778 = vld [vmem:[%s704] sm:$0x1]
        %v780 = vlaneseq
        %v781 = vshrl.u32 %v780, 7
        %v782 = vsub.s32 0, %v781
        %v783 = vrot.slane %v778, %v782
        %v786 = vsel %vm745, %v773, 0
        %788 = vmatprep.subr.mxu0 0.0
        %789 = vmatpush1.msra.mxu0 %v774
        %790 = vmatprep.subr.mxu0 0.0
        %791 = vmatpush1.msra.mxu0 %v775
        %792 = vmatprep.subr.mxu0 0.0
        %793 = vmatpush1.msra.mxu0 %v776
        %794 = vmatprep.subr.mxu0 0.0
        %795 = vmatpush1.msra.mxu0 %v777
        %796 = vmatprep.subr.mxu0 0.0
        %797 = vmatpush1.msra.mxu0 0.0
        %798 = vmatprep.subr.mxu0 0.0
        %799 = vmatpush1.msra.mxu0 0.0
        %800 = vmatprep.subr.mxu0 0.0
        %801 = vmatpush1.msra.mxu0 0.0
        %802 = vmatprep.subr.mxu0 0.0
        %803 = vmatpush1.msra.mxu0 0.0
        %804 = vmatprep.subr.mxu0 0.0
        %805 = vmatpush1.msra.mxu0 0.0
        %806 = vmatprep.subr.mxu0 0.0
        %807 = vmatpush1.msra.mxu0 0.0
        %808 = vmatprep.subr.mxu0 0.0
        %809 = vmatpush1.msra.mxu0 0.0
        %810 = vmatprep.subr.mxu0 0.0
        %811 = vmatpush1.msra.mxu0 0.0
        %812 = vmatprep.subr.mxu0 0.0
        %813 = vmatpush1.msra.mxu0 0.0
        %814 = vmatprep.subr.mxu0 0.0
        %815 = vmatpush1.msra.mxu0 0.0
        %816 = vmatprep.subr.mxu0 0.0
        %817 = vmatpush1.msra.mxu0 0.0
        %818 = vmatprep.subr.mxu0 0.0
        %819 = vmatpush1.msra.mxu0 0.0
        %820 = vmatprep.subr.mxu0 0.0
        %821 = vmatpush1.msra.mxu0 0.0
        %822 = vmatprep.subr.mxu0 0.0
        %823 = vmatpush1.msra.mxu0 0.0
        %824 = vmatprep.subr.mxu0 0.0
        %825 = vmatpush1.msra.mxu0 0.0
        %826 = vmatprep.subr.mxu0 0.0
        %827 = vmatpush1.msra.mxu0 0.0
        %828 = vmatprep.subr.mxu0 0.0
        %829 = vmatpush1.msra.mxu0 0.0
        %830 = vmatprep.subr.mxu0 0.0
        %831 = vmatpush1.msra.mxu0 0.0
        %832 = vmatprep.subr.mxu0 0.0
        %833 = vmatpush1.msra.mxu0 0.0
        %834 = vmatprep.subr.mxu0 0.0
        %835 = vmatpush1.msra.mxu0 0.0
        %836 = vmatprep.subr.mxu0 0.0
        %837 = vmatpush1.msra.mxu0 0.0
        %838 = vmatprep.subr.mxu0 0.0
        %839 = vmatpush1.msra.mxu0 0.0
        %840 = vmatprep.subr.mxu0 0.0
        %841 = vmatpush1.msra.mxu0 0.0
        %842 = vmatprep.subr.mxu0 0.0
        %843 = vmatpush1.msra.mxu0 0.0
        %844 = vmatprep.subr.mxu0 0.0
        %845 = vmatpush1.msra.mxu0 0.0
        %846 = vmatprep.subr.mxu0 0.0
        %847 = vmatpush1.msra.mxu0 0.0
        %848 = vmatprep.subr.mxu0 0.0
        %849 = vmatpush1.msra.mxu0 0.0
        %850 = vmatprep.subr.mxu0 0.0
        %851 = vmatpush1.msra.mxu0 0.0
        %852 = vmatprep.mubr.f32.mxu0 0.0
        %853 = vmatmul.mubr.f32.gmra.mrb[0].mxu0 %v786
        %v854 = vpop.f32.mrb[0].mxu0
        %v855 = vadd.f32 %v783, %v854
        %v856 = vpop.f32.mrb[0].mxu0
        %857 = vdwg.mxu0
        %v858 = vmul.f32 %v855, 0.35355338
        %v859 = vld [vmem:[%s690] sm:$0x1]
        %v861 = vlaneseq
        %v862 = vshrl.u32 %v861, 7
        %v863 = vsub.s32 0, %v862
        %v864 = vrot.slane %v859, %v863
        %867 = vrot.lane.b32.xlu0 %v855, 96
        %v868 = vpop.permute.xlu0 %867
        %vm869 = vcmask 64512
        %v871 = vsel %vm869, %v858, 0
        %v873 = vsel %vm869, %v868, 0
        %875 = vmatprep.subr.mxu0 0.0
        %876 = vmatpush1.xpose.msra.mxu0 %v873
        %877 = vmatprep.subr.mxu0 0.0
        %878 = vmatpush1.xpose.msra.mxu0 0.0
        %879 = vmatprep.subr.mxu0 0.0
        %880 = vmatpush1.xpose.msra.mxu0 0.0
        %881 = vmatprep.subr.mxu0 0.0
        %882 = vmatpush1.xpose.msra.mxu0 0.0
        %883 = vmatprep.subr.mxu0 0.0
        %884 = vmatpush1.xpose.msra.mxu0 0.0
        %885 = vmatprep.subr.mxu0 0.0
        %886 = vmatpush1.xpose.msra.mxu0 0.0
        %887 = vmatprep.subr.mxu0 0.0
        %888 = vmatpush1.xpose.msra.mxu0 0.0
        %889 = vmatprep.subr.mxu0 0.0
        %890 = vmatpush1.xpose.msra.mxu0 0.0
        %891 = vmatprep.subr.mxu0 0.0
        %892 = vmatpush1.xpose.msra.mxu0 0.0
        %893 = vmatprep.subr.mxu0 0.0
        %894 = vmatpush1.xpose.msra.mxu0 0.0
        %895 = vmatprep.subr.mxu0 0.0
        %896 = vmatpush1.xpose.msra.mxu0 0.0
        %897 = vmatprep.subr.mxu0 0.0
        %898 = vmatpush1.xpose.msra.mxu0 0.0
        %899 = vmatprep.subr.mxu0 0.0
        %900 = vmatpush1.xpose.msra.mxu0 0.0
        %901 = vmatprep.subr.mxu0 0.0
        %902 = vmatpush1.xpose.msra.mxu0 0.0
        %903 = vmatprep.subr.mxu0 0.0
        %904 = vmatpush1.xpose.msra.mxu0 0.0
        %905 = vmatprep.subr.mxu0 0.0
        %906 = vmatpush1.xpose.msra.mxu0 0.0
        %907 = vmatprep.subr.mxu0 0.0
        %908 = vmatpush1.xpose.msra.mxu0 0.0
        %909 = vmatprep.subr.mxu0 0.0
        %910 = vmatpush1.xpose.msra.mxu0 0.0
        %911 = vmatprep.subr.mxu0 0.0
        %912 = vmatpush1.xpose.msra.mxu0 0.0
        %913 = vmatprep.subr.mxu0 0.0
        %914 = vmatpush1.xpose.msra.mxu0 0.0
        %915 = vmatprep.subr.mxu0 0.0
        %916 = vmatpush1.xpose.msra.mxu0 0.0
        %917 = vmatprep.subr.mxu0 0.0
        %918 = vmatpush1.xpose.msra.mxu0 0.0
        %919 = vmatprep.subr.mxu0 0.0
        %920 = vmatpush1.xpose.msra.mxu0 0.0
        %921 = vmatprep.subr.mxu0 0.0
        %922 = vmatpush1.xpose.msra.mxu0 0.0
        %923 = vmatprep.subr.mxu0 0.0
        %924 = vmatpush1.xpose.msra.mxu0 0.0
        %925 = vmatprep.subr.mxu0 0.0
        %926 = vmatpush1.xpose.msra.mxu0 0.0
        %927 = vmatprep.subr.mxu0 0.0
        %928 = vmatpush1.xpose.msra.mxu0 0.0
        %929 = vmatprep.subr.mxu0 0.0
        %930 = vmatpush1.xpose.msra.mxu0 0.0
        %931 = vmatprep.subr.mxu0 0.0
        %932 = vmatpush1.xpose.msra.mxu0 0.0
        %933 = vmatprep.subr.mxu0 0.0
        %934 = vmatpush1.xpose.msra.mxu0 0.0
        %935 = vmatprep.subr.mxu0 0.0
        %936 = vmatpush1.xpose.msra.mxu0 0.0
        %937 = vmatprep.subr.mxu0 0.0
        %938 = vmatpush1.xpose.msra.mxu0 0.0
        %939 = vmatprep.mubr.f32.mxu0 0.0
        %940 = vmatmul.mubr.f32.gmra.mrb[0].mxu0 %v871
        %v941 = vpop.f32.mrb[0].mxu0
        %v942 = vadd.f32 %v864, %v941
        %v943 = vpop.f32.mrb[0].mxu0
        %944 = vdwg.mxu0
        %v945 = vsel %vm869, %v942, -inf
        %946 = vmax.xlane.f32.xlu0 %v945
        %v947 = vpop.xlane.xlu0 %946
        %v948 = vsub.f32 %v942, %v947
        %v949 = vmul.f32 %v948, 1.442695
        %v950 = vpow.pop %v949
        %v951 = vsel %vm869, %v950, 0.0
        %952 = vadd.xlane.f32.xlu0 %v951
        %v953 = vpop.xlane.xlu0 %952
        %v954 = vrcp.pop %v953
        %v955 = vmul.f32 %v950, %v954
        %956 = vrot.lane.b32.xlu0 %v855, 64
        %v957 = vpop.permute.xlu0 %956
        %v960 = vsel %vm869, %v955, 0
        %962 = vmatprep.subr.mxu0 0.0
        %963 = vmatpush1.msra.mxu0 %v957
        %964 = vmatprep.subr.mxu0 0.0
        %965 = vmatpush1.msra.mxu0 0.0
        %966 = vmatprep.subr.mxu0 0.0
        %967 = vmatpush1.msra.mxu0 0.0
        %968 = vmatprep.subr.mxu0 0.0
        %969 = vmatpush1.msra.mxu0 0.0
        %970 = vmatprep.subr.mxu0 0.0
        %971 = vmatpush1.msra.mxu0 0.0
        %972 = vmatprep.subr.mxu0 0.0
        %973 = vmatpush1.msra.mxu0 0.0
        %974 = vmatprep.subr.mxu0 0.0
        %975 = vmatpush1.msra.mxu0 0.0
        %976 = vmatprep.subr.mxu0 0.0
        %977 = vmatpush1.msra.mxu0 0.0
        %978 = vmatprep.subr.mxu0 0.0
        %979 = vmatpush1.msra.mxu0 0.0
        %980 = vmatprep.subr.mxu0 0.0
        %981 = vmatpush1.msra.mxu0 0.0
        %982 = vmatprep.subr.mxu0 0.0
        %983 = vmatpush1.msra.mxu0 0.0
        %984 = vmatprep.subr.mxu0 0.0
        %985 = vmatpush1.msra.mxu0 0.0
        %986 = vmatprep.subr.mxu0 0.0
        %987 = vmatpush1.msra.mxu0 0.0
        %988 = vmatprep.subr.mxu0 0.0
        %989 = vmatpush1.msra.mxu0 0.0
        %990 = vmatprep.subr.mxu0 0.0
        %991 = vmatpush1.msra.mxu0 0.0
        %992 = vmatprep.subr.mxu0 0.0
        %993 = vmatpush1.msra.mxu0 0.0
        %994 = vmatprep.subr.mxu0 0.0
        %995 = vmatpush1.msra.mxu0 0.0
        %996 = vmatprep.subr.mxu0 0.0
        %997 = vmatpush1.msra.mxu0 0.0
        %998 = vmatprep.subr.mxu0 0.0
        %999 = vmatpush1.msra.mxu0 0.0
        %1000 = vmatprep.subr.mxu0 0.0
        %1001 = vmatpush1.msra.mxu0 0.0
        %1002 = vmatprep.subr.mxu0 0.0
        %1003 = vmatpush1.msra.mxu0 0.0
        %1004 = vmatprep.subr.mxu0 0.0
        %1005 = vmatpush1.msra.mxu0 0.0
        %1006 = vmatprep.subr.mxu0 0.0
        %1007 = vmatpush1.msra.mxu0 0.0
        %1008 = vmatprep.subr.mxu0 0.0
        %1009 = vmatpush1.msra.mxu0 0.0
        %1010 = vmatprep.subr.mxu0 0.0
        %1011 = vmatpush1.msra.mxu0 0.0
        %1012 = vmatprep.subr.mxu0 0.0
        %1013 = vmatpush1.msra.mxu0 0.0
        %1014 = vmatprep.subr.mxu0 0.0
        %1015 = vmatpush1.msra.mxu0 0.0
        %1016 = vmatprep.subr.mxu0 0.0
        %1017 = vmatpush1.msra.mxu0 0.0
        %1018 = vmatprep.subr.mxu0 0.0
        %1019 = vmatpush1.msra.mxu0 0.0
        %1020 = vmatprep.subr.mxu0 0.0
        %1021 = vmatpush1.msra.mxu0 0.0
        %1022 = vmatprep.subr.mxu0 0.0
        %1023 = vmatpush1.msra.mxu0 0.0
        %1024 = vmatprep.subr.mxu0 0.0
        %1025 = vmatpush1.msra.mxu0 0.0
        %1026 = vmatprep.mubr.f32.mxu0 0.0
        %1027 = vmatmul.mubr.f32.gmra.mrb[0].mxu0 %v960
        %v1028 = vpop.f32.mrb[0].mxu0
        %v1029 = vadd.f32 0.0, %v1028
        %v1030 = vpop.f32.mrb[0].mxu0
        %1031 = vdwg.mxu0
        %1032 = vrot.lane.b32.xlu0 %v858, 120
        %v1033 = vpop.permute.xlu0 %1032
        %1034 = vrot.lane.b32.xlu0 %v855, 88
        %v1035 = vpop.permute.xlu0 %1034
        %v1036 = vsel %vm869, %v1033, 0
        %v1038 = vsel %vm869, %v1035, 0
        %1040 = vmatprep.subr.mxu0 0.0
        %1041 = vmatpush1.xpose.msra.mxu0 %v1038
        %1042 = vmatprep.subr.mxu0 0.0
        %1043 = vmatpush1.xpose.msra.mxu0 0.0
        %1044 = vmatprep.subr.mxu0 0.0
        %1045 = vmatpush1.xpose.msra.mxu0 0.0
        %1046 = vmatprep.subr.mxu0 0.0
        %1047 = vmatpush1.xpose.msra.mxu0 0.0
        %1048 = vmatprep.subr.mxu0 0.0
        %1049 = vmatpush1.xpose.msra.mxu0 0.0
        %1050 = vmatprep.subr.mxu0 0.0
        %1051 = vmatpush1.xpose.msra.mxu0 0.0
        %1052 = vmatprep.subr.mxu0 0.0
        %1053 = vmatpush1.xpose.msra.mxu0 0.0
        %1054 = vmatprep.subr.mxu0 0.0
        %1055 = vmatpush1.xpose.msra.mxu0 0.0
        %1056 = vmatprep.subr.mxu0 0.0
        %1057 = vmatpush1.xpose.msra.mxu0 0.0
        %1058 = vmatprep.subr.mxu0 0.0
        %1059 = vmatpush1.xpose.msra.mxu0 0.0
        %1060 = vmatprep.subr.mxu0 0.0
        %1061 = vmatpush1.xpose.msra.mxu0 0.0
        %1062 = vmatprep.subr.mxu0 0.0
        %1063 = vmatpush1.xpose.msra.mxu0 0.0
        %1064 = vmatprep.subr.mxu0 0.0
        %1065 = vmatpush1.xpose.msra.mxu0 0.0
        %1066 = vmatprep.subr.mxu0 0.0
        %1067 = vmatpush1.xpose.msra.mxu0 0.0
        %1068 = vmatprep.subr.mxu0 0.0
        %1069 = vmatpush1.xpose.msra.mxu0 0.0
        %1070 = vmatprep.subr.mxu0 0.0
        %1071 = vmatpush1.xpose.msra.mxu0 0.0
        %1072 = vmatprep.subr.mxu0 0.0
        %1073 = vmatpush1.xpose.msra.mxu0 0.0
        %1074 = vmatprep.subr.mxu0 0.0
        %1075 = vmatpush1.xpose.msra.mxu0 0.0
        %1076 = vmatprep.subr.mxu0 0.0
        %1077 = vmatpush1.xpose.msra.mxu0 0.0
        %1078 = vmatprep.subr.mxu0 0.0
        %1079 = vmatpush1.xpose.msra.mxu0 0.0
        %1080 = vmatprep.subr.mxu0 0.0
        %1081 = vmatpush1.xpose.msra.mxu0 0.0
        %1082 = vmatprep.subr.mxu0 0.0
        %1083 = vmatpush1.xpose.msra.mxu0 0.0
        %1084 = vmatprep.subr.mxu0 0.0
        %1085 = vmatpush1.xpose.msra.mxu0 0.0
        %1086 = vmatprep.subr.mxu0 0.0
        %1087 = vmatpush1.xpose.msra.mxu0 0.0
        %1088 = vmatprep.subr.mxu0 0.0
        %1089 = vmatpush1.xpose.msra.mxu0 0.0
        %1090 = vmatprep.subr.mxu0 0.0
        %1091 = vmatpush1.xpose.msra.mxu0 0.0
        %1092 = vmatprep.subr.mxu0 0.0
        %1093 = vmatpush1.xpose.msra.mxu0 0.0
        %1094 = vmatprep.subr.mxu0 0.0
        %1095 = vmatpush1.xpose.msra.mxu0 0.0
        %1096 = vmatprep.subr.mxu0 0.0
        %1097 = vmatpush1.xpose.msra.mxu0 0.0
        %1098 = vmatprep.subr.mxu0 0.0
        %1099 = vmatpush1.xpose.msra.mxu0 0.0
        %1100 = vmatprep.subr.mxu0 0.0
        %1101 = vmatpush1.xpose.msra.mxu0 0.0
        %1102 = vmatprep.subr.mxu0 0.0
        %1103 = vmatpush1.xpose.msra.mxu0 0.0
        %1104 = vmatprep.mubr.f32.mxu0 0.0
        %1105 = vmatmul.mubr.f32.gmra.mrb[0].mxu0 %v1036
        %v1106 = vpop.f32.mrb[0].mxu0
        %v1107 = vadd.f32 %v864, %v1106
        %v1108 = vpop.f32.mrb[0].mxu0
        %1109 = vdwg.mxu0
        %v1110 = vsel %vm869, %v1107, -inf
        %1111 = vmax.xlane.f32.xlu0 %v1110
        %v1112 = vpop.xlane.xlu0 %1111
        %v1113 = vsub.f32 %v1107, %v1112
        %v1114 = vmul.f32 %v1113, 1.442695
        %v1115 = vpow.pop %v1114
        %v1116 = vsel %vm869, %v1115, 0.0
        %1117 = vadd.xlane.f32.xlu0 %v1116
        %v1118 = vpop.xlane.xlu0 %1117
        %v1119 = vrcp.pop %v1118
        %v1120 = vmul.f32 %v1115, %v1119
        %1121 = vrot.lane.b32.xlu0 %v855, 56
        %v1122 = vpop.permute.xlu0 %1121
        %v1125 = vsel %vm869, %v1120, 0
        %1127 = vmatprep.subr.mxu0 0.0
        %1128 = vmatpush1.msra.mxu0 %v1122
        %1129 = vmatprep.subr.mxu0 0.0
        %1130 = vmatpush1.msra.mxu0 0.0
        %1131 = vmatprep.subr.mxu0 0.0
        %1132 = vmatpush1.msra.mxu0 0.0
        %1133 = vmatprep.subr.mxu0 0.0
        %1134 = vmatpush1.msra.mxu0 0.0
        %1135 = vmatprep.subr.mxu0 0.0
        %1136 = vmatpush1.msra.mxu0 0.0
        %1137 = vmatprep.subr.mxu0 0.0
        %1138 = vmatpush1.msra.mxu0 0.0
        %1139 = vmatprep.subr.mxu0 0.0
        %1140 = vmatpush1.msra.mxu0 0.0
        %1141 = vmatprep.subr.mxu0 0.0
        %1142 = vmatpush1.msra.mxu0 0.0
        %1143 = vmatprep.subr.mxu0 0.0
        %1144 = vmatpush1.msra.mxu0 0.0
        %1145 = vmatprep.subr.mxu0 0.0
        %1146 = vmatpush1.msra.mxu0 0.0
        %1147 = vmatprep.subr.mxu0 0.0
        %1148 = vmatpush1.msra.mxu0 0.0
        %1149 = vmatprep.subr.mxu0 0.0
        %1150 = vmatpush1.msra.mxu0 0.0
        %1151 = vmatprep.subr.mxu0 0.0
        %1152 = vmatpush1.msra.mxu0 0.0
        %1153 = vmatprep.subr.mxu0 0.0
        %1154 = vmatpush1.msra.mxu0 0.0
        %1155 = vmatprep.subr.mxu0 0.0
        %1156 = vmatpush1.msra.mxu0 0.0
        %1157 = vmatprep.subr.mxu0 0.0
        %1158 = vmatpush1.msra.mxu0 0.0
        %1159 = vmatprep.subr.mxu0 0.0
        %1160 = vmatpush1.msra.mxu0 0.0
        %1161 = vmatprep.subr.mxu0 0.0
        %1162 = vmatpush1.msra.mxu0 0.0
        %1163 = vmatprep.subr.mxu0 0.0
        %1164 = vmatpush1.msra.mxu0 0.0
        %1165 = vmatprep.subr.mxu0 0.0
        %1166 = vmatpush1.msra.mxu0 0.0
        %1167 = vmatprep.subr.mxu0 0.0
        %1168 = vmatpush1.msra.mxu0 0.0
        %1169 = vmatprep.subr.mxu0 0.0
        %1170 = vmatpush1.msra.mxu0 0.0
        %1171 = vmatprep.subr.mxu0 0.0
        %1172 = vmatpush1.msra.mxu0 0.0
        %1173 = vmatprep.subr.mxu0 0.0
        %1174 = vmatpush1.msra.mxu0 0.0
        %1175 = vmatprep.subr.mxu0 0.0
        %1176 = vmatpush1.msra.mxu0 0.0
        %1177 = vmatprep.subr.mxu0 0.0
        %1178 = vmatpush1.msra.mxu0 0.0
        %1179 = vmatprep.subr.mxu0 0.0
        %1180 = vmatpush1.msra.mxu0 0.0
        %1181 = vmatprep.subr.mxu0 0.0
        %1182 = vmatpush1.msra.mxu0 0.0
        %1183 = vmatprep.subr.mxu0 0.0
        %1184 = vmatpush1.msra.mxu0 0.0
        %1185 = vmatprep.subr.mxu0 0.0
        %1186 = vmatpush1.msra.mxu0 0.0
        %1187 = vmatprep.subr.mxu0 0.0
        %1188 = vmatpush1.msra.mxu0 0.0
        %1189 = vmatprep.subr.mxu0 0.0
        %1190 = vmatpush1.msra.mxu0 0.0
        %1191 = vmatprep.mubr.f32.mxu0 0.0
        %1192 = vmatmul.mubr.f32.gmra.mrb[0].mxu0 %v1125
        %v1193 = vpop.f32.mrb[0].mxu0
        %v1194 = vadd.f32 0.0, %v1193
        %v1195 = vpop.f32.mrb[0].mxu0
        %1196 = vdwg.mxu0
        %1197 = vrot.lane.b32.xlu0 %v858, 112
        %v1198 = vpop.permute.xlu0 %1197
        %1199 = vrot.lane.b32.xlu0 %v855, 80
        %v1200 = vpop.permute.xlu0 %1199
        %v1201 = vsel %vm869, %v1198, 0
        %v1203 = vsel %vm869, %v1200, 0
        %1205 = vmatprep.subr.mxu0 0.0
        %1206 = vmatpush1.xpose.msra.mxu0 %v1203
        %1207 = vmatprep.subr.mxu0 0.0
        %1208 = vmatpush1.xpose.msra.mxu0 0.0
        %1209 = vmatprep.subr.mxu0 0.0
        %1210 = vmatpush1.xpose.msra.mxu0 0.0
        %1211 = vmatprep.subr.mxu0 0.0
        %1212 = vmatpush1.xpose.msra.mxu0 0.0
        %1213 = vmatprep.subr.mxu0 0.0
        %1214 = vmatpush1.xpose.msra.mxu0 0.0
        %1215 = vmatprep.subr.mxu0 0.0
        %1216 = vmatpush1.xpose.msra.mxu0 0.0
        %1217 = vmatprep.subr.mxu0 0.0
        %1218 = vmatpush1.xpose.msra.mxu0 0.0
        %1219 = vmatprep.subr.mxu0 0.0
        %1220 = vmatpush1.xpose.msra.mxu0 0.0
        %1221 = vmatprep.subr.mxu0 0.0
        %1222 = vmatpush1.xpose.msra.mxu0 0.0
        %1223 = vmatprep.subr.mxu0 0.0
        %1224 = vmatpush1.xpose.msra.mxu0 0.0
        %1225 = vmatprep.subr.mxu0 0.0
        %1226 = vmatpush1.xpose.msra.mxu0 0.0
        %1227 = vmatprep.subr.mxu0 0.0
        %1228 = vmatpush1.xpose.msra.mxu0 0.0
        %1229 = vmatprep.subr.mxu0 0.0
        %1230 = vmatpush1.xpose.msra.mxu0 0.0
        %1231 = vmatprep.subr.mxu0 0.0
        %1232 = vmatpush1.xpose.msra.mxu0 0.0
        %1233 = vmatprep.subr.mxu0 0.0
        %1234 = vmatpush1.xpose.msra.mxu0 0.0
        %1235 = vmatprep.subr.mxu0 0.0
        %1236 = vmatpush1.xpose.msra.mxu0 0.0
        %1237 = vmatprep.subr.mxu0 0.0
        %1238 = vmatpush1.xpose.msra.mxu0 0.0
        %1239 = vmatprep.subr.mxu0 0.0
        %1240 = vmatpush1.xpose.msra.mxu0 0.0
        %1241 = vmatprep.subr.mxu0 0.0
        %1242 = vmatpush1.xpose.msra.mxu0 0.0
        %1243 = vmatprep.subr.mxu0 0.0
        %1244 = vmatpush1.xpose.msra.mxu0 0.0
        %1245 = vmatprep.subr.mxu0 0.0
        %1246 = vmatpush1.xpose.msra.mxu0 0.0
        %1247 = vmatprep.subr.mxu0 0.0
        %1248 = vmatpush1.xpose.msra.mxu0 0.0
        %1249 = vmatprep.subr.mxu0 0.0
        %1250 = vmatpush1.xpose.msra.mxu0 0.0
        %1251 = vmatprep.subr.mxu0 0.0
        %1252 = vmatpush1.xpose.msra.mxu0 0.0
        %1253 = vmatprep.subr.mxu0 0.0
        %1254 = vmatpush1.xpose.msra.mxu0 0.0
        %1255 = vmatprep.subr.mxu0 0.0
        %1256 = vmatpush1.xpose.msra.mxu0 0.0
        %1257 = vmatprep.subr.mxu0 0.0
        %1258 = vmatpush1.xpose.msra.mxu0 0.0
        %1259 = vmatprep.subr.mxu0 0.0
        %1260 = vmatpush1.xpose.msra.mxu0 0.0
        %1261 = vmatprep.subr.mxu0 0.0
        %1262 = vmatpush1.xpose.msra.mxu0 0.0
        %1263 = vmatprep.subr.mxu0 0.0
        %1264 = vmatpush1.xpose.msra.mxu0 0.0
        %1265 = vmatprep.subr.mxu0 0.0
        %1266 = vmatpush1.xpose.msra.mxu0 0.0
        %1267 = vmatprep.subr.mxu0 0.0
        %1268 = vmatpush1.xpose.msra.mxu0 0.0
        %1269 = vmatprep.mubr.f32.mxu0 0.0
        %1270 = vmatmul.mubr.f32.gmra.mrb[0].mxu0 %v1201
        %v1271 = vpop.f32.mrb[0].mxu0
        %v1272 = vadd.f32 %v864, %v1271
        %v1273 = vpop.f32.mrb[0].mxu0
        %1274 = vdwg.mxu0
        %v1275 = vsel %vm869, %v1272, -inf
        %1276 = vmax.xlane.f32.xlu0 %v1275
        %v1277 = vpop.xlane.xlu0 %1276
        %v1278 = vsub.f32 %v1272, %v1277
        %v1279 = vmul.f32 %v1278, 1.442695
        %v1280 = vpow.pop %v1279
        %v1281 = vsel %vm869, %v1280, 0.0
        %1282 = vadd.xlane.f32.xlu0 %v1281
        %v1283 = vpop.xlane.xlu0 %1282
        %v1284 = vrcp.pop %v1283
        %v1285 = vmul.f32 %v1280, %v1284
        %1286 = vrot.lane.b32.xlu0 %v855, 48
        %v1287 = vpop.permute.xlu0 %1286
        %v1290 = vsel %vm869, %v1285, 0
        %1292 = vmatprep.subr.mxu0 0.0
        %1293 = vmatpush1.msra.mxu0 %v1287
        %1294 = vmatprep.subr.mxu0 0.0
        %1295 = vmatpush1.msra.mxu0 0.0
        %1296 = vmatprep.subr.mxu0 0.0
        %1297 = vmatpush1.msra.mxu0 0.0
        %1298 = vmatprep.subr.mxu0 0.0
        %1299 = vmatpush1.msra.mxu0 0.0
        %1300 = vmatprep.subr.mxu0 0.0
        %1301 = vmatpush1.msra.mxu0 0.0
        %1302 = vmatprep.subr.mxu0 0.0
        %1303 = vmatpush1.msra.mxu0 0.0
        %1304 = vmatprep.subr.mxu0 0.0
        %1305 = vmatpush1.msra.mxu0 0.0
        %1306 = vmatprep.subr.mxu0 0.0
        %1307 = vmatpush1.msra.mxu0 0.0
        %1308 = vmatprep.subr.mxu0 0.0
        %1309 = vmatpush1.msra.mxu0 0.0
        %1310 = vmatprep.subr.mxu0 0.0
        %1311 = vmatpush1.msra.mxu0 0.0
        %1312 = vmatprep.subr.mxu0 0.0
        %1313 = vmatpush1.msra.mxu0 0.0
        %1314 = vmatprep.subr.mxu0 0.0
        %1315 = vmatpush1.msra.mxu0 0.0
        %1316 = vmatprep.subr.mxu0 0.0
        %1317 = vmatpush1.msra.mxu0 0.0
        %1318 = vmatprep.subr.mxu0 0.0
        %1319 = vmatpush1.msra.mxu0 0.0
        %1320 = vmatprep.subr.mxu0 0.0
        %1321 = vmatpush1.msra.mxu0 0.0
        %1322 = vmatprep.subr.mxu0 0.0
        %1323 = vmatpush1.msra.mxu0 0.0
        %1324 = vmatprep.subr.mxu0 0.0
        %1325 = vmatpush1.msra.mxu0 0.0
        %1326 = vmatprep.subr.mxu0 0.0
        %1327 = vmatpush1.msra.mxu0 0.0
        %1328 = vmatprep.subr.mxu0 0.0
        %1329 = vmatpush1.msra.mxu0 0.0
        %1330 = vmatprep.subr.mxu0 0.0
        %1331 = vmatpush1.msra.mxu0 0.0
        %1332 = vmatprep.subr.mxu0 0.0
        %1333 = vmatpush1.msra.mxu0 0.0
        %1334 = vmatprep.subr.mxu0 0.0
        %1335 = vmatpush1.msra.mxu0 0.0
        %1336 = vmatprep.subr.mxu0 0.0
        %1337 = vmatpush1.msra.mxu0 0.0
        %1338 = vmatprep.subr.mxu0 0.0
        %1339 = vmatpush1.msra.mxu0 0.0
        %1340 = vmatprep.subr.mxu0 0.0
        %1341 = vmatpush1.msra.mxu0 0.0
        %1342 = vmatprep.subr.mxu0 0.0
        %1343 = vmatpush1.msra.mxu0 0.0
        %1344 = vmatprep.subr.mxu0 0.0
        %1345 = vmatpush1.msra.mxu0 0.0
        %1346 = vmatprep.subr.mxu0 0.0
        %1347 = vmatpush1.msra.mxu0 0.0
        %1348 = vmatprep.subr.mxu0 0.0
        %1349 = vmatpush1.msra.mxu0 0.0
        %1350 = vmatprep.subr.mxu0 0.0
        %1351 = vmatpush1.msra.mxu0 0.0
        %1352 = vmatprep.subr.mxu0 0.0
        %1353 = vmatpush1.msra.mxu0 0.0
        %1354 = vmatprep.subr.mxu0 0.0
        %1355 = vmatpush1.msra.mxu0 0.0
        %1356 = vmatprep.mubr.f32.mxu0 0.0
        %1357 = vmatmul.mubr.f32.gmra.mrb[0].mxu0 %v1290
        %v1358 = vpop.f32.mrb[0].mxu0
        %v1359 = vadd.f32 0.0, %v1358
        %v1360 = vpop.f32.mrb[0].mxu0
        %1361 = vdwg.mxu0
        %1362 = vrot.lane.b32.xlu0 %v858, 104
        %v1363 = vpop.permute.xlu0 %1362
        %1364 = vrot.lane.b32.xlu0 %v855, 72
        %v1365 = vpop.permute.xlu0 %1364
        %v1366 = vsel %vm869, %v1363, 0
        %v1368 = vsel %vm869, %v1365, 0
        %1370 = vmatprep.subr.mxu0 0.0
        %1371 = vmatpush1.xpose.msra.mxu0 %v1368
        %1372 = vmatprep.subr.mxu0 0.0
        %1373 = vmatpush1.xpose.msra.mxu0 0.0
        %1374 = vmatprep.subr.mxu0 0.0
        %1375 = vmatpush1.xpose.msra.mxu0 0.0
        %1376 = vmatprep.subr.mxu0 0.0
        %1377 = vmatpush1.xpose.msra.mxu0 0.0
        %1378 = vmatprep.subr.mxu0 0.0
        %1379 = vmatpush1.xpose.msra.mxu0 0.0
        %1380 = vmatprep.subr.mxu0 0.0
        %1381 = vmatpush1.xpose.msra.mxu0 0.0
        %1382 = vmatprep.subr.mxu0 0.0
        %1383 = vmatpush1.xpose.msra.mxu0 0.0
        %1384 = vmatprep.subr.mxu0 0.0
        %1385 = vmatpush1.xpose.msra.mxu0 0.0
        %1386 = vmatprep.subr.mxu0 0.0
        %1387 = vmatpush1.xpose.msra.mxu0 0.0
        %1388 = vmatprep.subr.mxu0 0.0
        %1389 = vmatpush1.xpose.msra.mxu0 0.0
        %1390 = vmatprep.subr.mxu0 0.0
        %1391 = vmatpush1.xpose.msra.mxu0 0.0
        %1392 = vmatprep.subr.mxu0 0.0
        %1393 = vmatpush1.xpose.msra.mxu0 0.0
        %1394 = vmatprep.subr.mxu0 0.0
        %1395 = vmatpush1.xpose.msra.mxu0 0.0
        %1396 = vmatprep.subr.mxu0 0.0
        %1397 = vmatpush1.xpose.msra.mxu0 0.0
        %1398 = vmatprep.subr.mxu0 0.0
        %1399 = vmatpush1.xpose.msra.mxu0 0.0
        %1400 = vmatprep.subr.mxu0 0.0
        %1401 = vmatpush1.xpose.msra.mxu0 0.0
        %1402 = vmatprep.subr.mxu0 0.0
        %1403 = vmatpush1.xpose.msra.mxu0 0.0
        %1404 = vmatprep.subr.mxu0 0.0
        %1405 = vmatpush1.xpose.msra.mxu0 0.0
        %1406 = vmatprep.subr.mxu0 0.0
        %1407 = vmatpush1.xpose.msra.mxu0 0.0
        %1408 = vmatprep.subr.mxu0 0.0
        %1409 = vmatpush1.xpose.msra.mxu0 0.0
        %1410 = vmatprep.subr.mxu0 0.0
        %1411 = vmatpush1.xpose.msra.mxu0 0.0
        %1412 = vmatprep.subr.mxu0 0.0
        %1413 = vmatpush1.xpose.msra.mxu0 0.0
        %1414 = vmatprep.subr.mxu0 0.0
        %1415 = vmatpush1.xpose.msra.mxu0 0.0
        %1416 = vmatprep.subr.mxu0 0.0
        %1417 = vmatpush1.xpose.msra.mxu0 0.0
        %1418 = vmatprep.subr.mxu0 0.0
        %1419 = vmatpush1.xpose.msra.mxu0 0.0
        %1420 = vmatprep.subr.mxu0 0.0
        %1421 = vmatpush1.xpose.msra.mxu0 0.0
        %1422 = vmatprep.subr.mxu0 0.0
        %1423 = vmatpush1.xpose.msra.mxu0 0.0
        %1424 = vmatprep.subr.mxu0 0.0
        %1425 = vmatpush1.xpose.msra.mxu0 0.0
        %1426 = vmatprep.subr.mxu0 0.0
        %1427 = vmatpush1.xpose.msra.mxu0 0.0
        %1428 = vmatprep.subr.mxu0 0.0
        %1429 = vmatpush1.xpose.msra.mxu0 0.0
        %1430 = vmatprep.subr.mxu0 0.0
        %1431 = vmatpush1.xpose.msra.mxu0 0.0
        %1432 = vmatprep.subr.mxu0 0.0
        %1433 = vmatpush1.xpose.msra.mxu0 0.0
        %1434 = vmatprep.mubr.f32.mxu0 0.0
        %1435 = vmatmul.mubr.f32.gmra.mrb[0].mxu0 %v1366
        %v1436 = vpop.f32.mrb[0].mxu0
        %v1437 = vadd.f32 %v864, %v1436
        %v1438 = vpop.f32.mrb[0].mxu0
        %1439 = vdwg.mxu0
        %v1440 = vsel %vm869, %v1437, -inf
        %1441 = vmax.xlane.f32.xlu0 %v1440
        %v1442 = vpop.xlane.xlu0 %1441
        %v1443 = vsub.f32 %v1437, %v1442
        %v1444 = vmul.f32 %v1443, 1.442695
        %v1445 = vpow.pop %v1444
        %v1446 = vsel %vm869, %v1445, 0.0
        %1447 = vadd.xlane.f32.xlu0 %v1446
        %v1448 = vpop.xlane.xlu0 %1447
        %v1449 = vrcp.pop %v1448
        %v1450 = vmul.f32 %v1445, %v1449
        %1451 = vrot.lane.b32.xlu0 %v855, 40
        %v1452 = vpop.permute.xlu0 %1451
        %v1455 = vsel %vm869, %v1450, 0
        %1457 = vmatprep.subr.mxu0 0.0
        %1458 = vmatpush1.msra.mxu0 %v1452
        %1459 = vmatprep.subr.mxu0 0.0
        %1460 = vmatpush1.msra.mxu0 0.0
        %1461 = vmatprep.subr.mxu0 0.0
        %1462 = vmatpush1.msra.mxu0 0.0
        %1463 = vmatprep.subr.mxu0 0.0
        %1464 = vmatpush1.msra.mxu0 0.0
        %1465 = vmatprep.subr.mxu0 0.0
        %1466 = vmatpush1.msra.mxu0 0.0
        %1467 = vmatprep.subr.mxu0 0.0
        %1468 = vmatpush1.msra.mxu0 0.0
        %1469 = vmatprep.subr.mxu0 0.0
        %1470 = vmatpush1.msra.mxu0 0.0
        %1471 = vmatprep.subr.mxu0 0.0
        %1472 = vmatpush1.msra.mxu0 0.0
        %1473 = vmatprep.subr.mxu0 0.0
        %1474 = vmatpush1.msra.mxu0 0.0
        %1475 = vmatprep.subr.mxu0 0.0
        %1476 = vmatpush1.msra.mxu0 0.0
        %1477 = vmatprep.subr.mxu0 0.0
        %1478 = vmatpush1.msra.mxu0 0.0
        %1479 = vmatprep.subr.mxu0 0.0
        %1480 = vmatpush1.msra.mxu0 0.0
        %1481 = vmatprep.subr.mxu0 0.0
        %1482 = vmatpush1.msra.mxu0 0.0
        %1483 = vmatprep.subr.mxu0 0.0
        %1484 = vmatpush1.msra.mxu0 0.0
        %1485 = vmatprep.subr.mxu0 0.0
        %1486 = vmatpush1.msra.mxu0 0.0
        %1487 = vmatprep.subr.mxu0 0.0
        %1488 = vmatpush1.msra.mxu0 0.0
        %1489 = vmatprep.subr.mxu0 0.0
        %1490 = vmatpush1.msra.mxu0 0.0
        %1491 = vmatprep.subr.mxu0 0.0
        %1492 = vmatpush1.msra.mxu0 0.0
        %1493 = vmatprep.subr.mxu0 0.0
        %1494 = vmatpush1.msra.mxu0 0.0
        %1495 = vmatprep.subr.mxu0 0.0
        %1496 = vmatpush1.msra.mxu0 0.0
        %1497 = vmatprep.subr.mxu0 0.0
        %1498 = vmatpush1.msra.mxu0 0.0
        %1499 = vmatprep.subr.mxu0 0.0
        %1500 = vmatpush1.msra.mxu0 0.0
        %1501 = vmatprep.subr.mxu0 0.0
        %1502 = vmatpush1.msra.mxu0 0.0
        %1503 = vmatprep.subr.mxu0 0.0
        %1504 = vmatpush1.msra.mxu0 0.0
        %1505 = vmatprep.subr.mxu0 0.0
        %1506 = vmatpush1.msra.mxu0 0.0
        %1507 = vmatprep.subr.mxu0 0.0
        %1508 = vmatpush1.msra.mxu0 0.0
        %1509 = vmatprep.subr.mxu0 0.0
        %1510 = vmatpush1.msra.mxu0 0.0
        %1511 = vmatprep.subr.mxu0 0.0
        %1512 = vmatpush1.msra.mxu0 0.0
        %1513 = vmatprep.subr.mxu0 0.0
        %1514 = vmatpush1.msra.mxu0 0.0
        %1515 = vmatprep.subr.mxu0 0.0
        %1516 = vmatpush1.msra.mxu0 0.0
        %1517 = vmatprep.subr.mxu0 0.0
        %1518 = vmatpush1.msra.mxu0 0.0
        %1519 = vmatprep.subr.mxu0 0.0
        %1520 = vmatpush1.msra.mxu0 0.0
        %1521 = vmatprep.mubr.f32.mxu0 0.0
        %1522 = vmatmul.mubr.f32.gmra.mrb[0].mxu0 %v1455
        %v1523 = vpop.f32.mrb[0].mxu0
        %v1524 = vadd.f32 0.0, %v1523
        %v1525 = vpop.f32.mrb[0].mxu0
        %1526 = vdwg.mxu0
        %1528 = vrot.lane.b32.xlu0 %v1194, 8
        %v1529 = vpop.permute.xlu0 %1528
        %1532 = vrot.lane.b32.xlu0 %v1359, 16
        %v1533 = vpop.permute.xlu0 %1532
        %1536 = vrot.lane.b32.xlu0 %v1524, 24
        %v1537 = vpop.permute.xlu0 %1536
        %v1539 = vsel %vm869, %v1029, %v1529
        %vm1540 = vcmask 130048
        %v1541 = vsel %vm1540, %v1539, %v1533
        %vm1542 = vcmask 195584
        %v1543 = vsel %vm1542, %v1541, %v1537
        %v1544 = vld [vmem:[%s709] sm:$0xff]
        %v1545 = vld [vmem:[%s709 + $0x8] sm:$0xff]
        %v1546 = vld [vmem:[%s709 + $0x10] sm:$0xff]
        %v1547 = vld [vmem:[%s709 + $0x18] sm:$0xff]
        %v1548 = vld [vmem:[%s712] sm:$0x1]
        %v1550 = vlaneseq
        %v1551 = vshrl.u32 %v1550, 7
        %v1552 = vsub.s32 0, %v1551
        %v1553 = vrot.slane %v1548, %v1552
        %v1556 = vsel %vm745, %v1543, 0
        %1558 = vmatprep.subr.mxu0 0.0
        %1559 = vmatpush1.msra.mxu0 %v1544
        %1560 = vmatprep.subr.mxu0 0.0
        %1561 = vmatpush1.msra.mxu0 %v1545
        %1562 = vmatprep.subr.mxu0 0.0
        %1563 = vmatpush1.msra.mxu0 %v1546
        %1564 = vmatprep.subr.mxu0 0.0
        %1565 = vmatpush1.msra.mxu0 %v1547
        %1566 = vmatprep.subr.mxu0 0.0
        %1567 = vmatpush1.msra.mxu0 0.0
        %1568 = vmatprep.subr.mxu0 0.0
        %1569 = vmatpush1.msra.mxu0 0.0
        %1570 = vmatprep.subr.mxu0 0.0
        %1571 = vmatpush1.msra.mxu0 0.0
        %1572 = vmatprep.subr.mxu0 0.0
        %1573 = vmatpush1.msra.mxu0 0.0
        %1574 = vmatprep.subr.mxu0 0.0
        %1575 = vmatpush1.msra.mxu0 0.0
        %1576 = vmatprep.subr.mxu0 0.0
        %1577 = vmatpush1.msra.mxu0 0.0
        %1578 = vmatprep.subr.mxu0 0.0
        %1579 = vmatpush1.msra.mxu0 0.0
        %1580 = vmatprep.subr.mxu0 0.0
        %1581 = vmatpush1.msra.mxu0 0.0
        %1582 = vmatprep.subr.mxu0 0.0
        %1583 = vmatpush1.msra.mxu0 0.0
        %1584 = vmatprep.subr.mxu0 0.0
        %1585 = vmatpush1.msra.mxu0 0.0
        %1586 = vmatprep.subr.mxu0 0.0
        %1587 = vmatpush1.msra.mxu0 0.0
        %1588 = vmatprep.subr.mxu0 0.0
        %1589 = vmatpush1.msra.mxu0 0.0
        %1590 = vmatprep.subr.mxu0 0.0
        %1591 = vmatpush1.msra.mxu0 0.0
        %1592 = vmatprep.subr.mxu0 0.0
        %1593 = vmatpush1.msra.mxu0 0.0
        %1594 = vmatprep.subr.mxu0 0.0
        %1595 = vmatpush1.msra.mxu0 0.0
        %1596 = vmatprep.subr.mxu0 0.0
        %1597 = vmatpush1.msra.mxu0 0.0
        %1598 = vmatprep.subr.mxu0 0.0
        %1599 = vmatpush1.msra.mxu0 0.0
        %1600 = vmatprep.subr.mxu0 0.0
        %1601 = vmatpush1.msra.mxu0 0.0
        %1602 = vmatprep.subr.mxu0 0.0
        %1603 = vmatpush1.msra.mxu0 0.0
        %1604 = vmatprep.subr.mxu0 0.0
        %1605 = vmatpush1.msra.mxu0 0.0
        %1606 = vmatprep.subr.mxu0 0.0
        %1607 = vmatpush1.msra.mxu0 0.0
        %1608 = vmatprep.subr.mxu0 0.0
        %1609 = vmatpush1.msra.mxu0 0.0
        %1610 = vmatprep.subr.mxu0 0.0
        %1611 = vmatpush1.msra.mxu0 0.0
        %1612 = vmatprep.subr.mxu0 0.0
        %1613 = vmatpush1.msra.mxu0 0.0
        %1614 = vmatprep.subr.mxu0 0.0
        %1615 = vmatpush1.msra.mxu0 0.0
        %1616 = vmatprep.subr.mxu0 0.0
        %1617 = vmatpush1.msra.mxu0 0.0
        %1618 = vmatprep.subr.mxu0 0.0
        %1619 = vmatpush1.msra.mxu0 0.0
        %1620 = vmatprep.subr.mxu0 0.0
        %1621 = vmatpush1.msra.mxu0 0.0
        %1622 = vmatprep.mubr.f32.mxu0 0.0
        %1623 = vmatmul.mubr.f32.gmra.mrb[0].mxu0 %v1556
        %v1624 = vpop.f32.mrb[0].mxu0
        %v1625 = vadd.f32 %v1553, %v1624
        %v1626 = vpop.f32.mrb[0].mxu0
        %1627 = vdwg.mxu0
        %v1628 = vadd.f32 %v1625, %v742
        %v1629 = vld [vmem:[%s715] sm:$0x1]
        %v1630 = vld [vmem:[%s718] sm:$0x1]
        %v1631 = vsel %vm745, %v1628, 0.0
        %1632 = vadd.xlane.f32.xlu0 %v1631
        %v1633 = vpop.xlane.xlu0 %1632
        %v1634 = vmul.f32 %v1633, %v749
        %v1635 = vsub.f32 %v1628, %v1634
        %v1636 = vmul.f32 %v1635, %v1635
        %v1637 = vsel %vm745, %v1636, 0.0
        %1638 = vadd.xlane.f32.xlu0 %v1637
        %v1639 = vpop.xlane.xlu0 %1638
        %v1640 = vmul.f32 %v1639, %v749
        %v1641 = vadd.f32 %v1640, 1e-05
        %v1642 = vrsqrt.pop %v1641
        %v1643 = vmul.f32 %v1635, %v1642
        %v1645 = vlaneseq
        %v1646 = vshrl.u32 %v1645, 7
        %v1647 = vsub.s32 0, %v1646
        %v1648 = vrot.slane %v1629, %v1647
        %v1650 = vmul.f32 %v1643, %v1648
        %v1652 = vlaneseq
        %v1653 = vshrl.u32 %v1652, 7
        %v1654 = vsub.s32 0, %v1653
        %v1655 = vrot.slane %v1630, %v1654
        %v1657 = vadd.f32 %v1650, %v1655
        %v1658 = vld [vmem:[%s723] sm:$0xff]
        %v1659 = vld [vmem:[%s723 + $0x8] sm:$0xff]
        %v1660 = vld [vmem:[%s723 + $0x10] sm:$0xff]
        %v1661 = vld [vmem:[%s723 + $0x18] sm:$0xff]
        %v1662 = vld [vmem:[%s726] sm:$0x1]
        %v1664 = vlaneseq
        %v1665 = vshrl.u32 %v1664, 7
        %v1666 = vsub.s32 0, %v1665
        %v1667 = vrot.slane %v1662, %v1666
        %v1670 = vsel %vm745, %v1657, 0
        %1672 = vmatprep.subr.mxu0 0.0
        %1673 = vmatpush1.msra.mxu0 %v1658
        %1674 = vmatprep.subr.mxu0 0.0
        %1675 = vmatpush1.msra.mxu0 %v1659
        %1676 = vmatprep.subr.mxu0 0.0
        %1677 = vmatpush1.msra.mxu0 %v1660
        %1678 = vmatprep.subr.mxu0 0.0
        %1679 = vmatpush1.msra.mxu0 %v1661
        %1680 = vmatprep.subr.mxu0 0.0
        %1681 = vmatpush1.msra.mxu0 0.0
        %1682 = vmatprep.subr.mxu0 0.0
        %1683 = vmatpush1.msra.mxu0 0.0
        %1684 = vmatprep.subr.mxu0 0.0
        %1685 = vmatpush1.msra.mxu0 0.0
        %1686 = vmatprep.subr.mxu0 0.0
        %1687 = vmatpush1.msra.mxu0 0.0
        %1688 = vmatprep.subr.mxu0 0.0
        %1689 = vmatpush1.msra.mxu0 0.0
        %1690 = vmatprep.subr.mxu0 0.0
        %1691 = vmatpush1.msra.mxu0 0.0
        %1692 = vmatprep.subr.mxu0 0.0
        %1693 = vmatpush1.msra.mxu0 0.0
        %1694 = vmatprep.subr.mxu0 0.0
        %1695 = vmatpush1.msra.mxu0 0.0
        %1696 = vmatprep.subr.mxu0 0.0
        %1697 = vmatpush1.msra.mxu0 0.0
        %1698 = vmatprep.subr.mxu0 0.0
        %1699 = vmatpush1.msra.mxu0 0.0
        %1700 = vmatprep.subr.mxu0 0.0
        %1701 = vmatpush1.msra.mxu0 0.0
        %1702 = vmatprep.subr.mxu0 0.0
        %1703 = vmatpush1.msra.mxu0 0.0
        %1704 = vmatprep.subr.mxu0 0.0
        %1705 = vmatpush1.msra.mxu0 0.0
        %1706 = vmatprep.subr.mxu0 0.0
        %1707 = vmatpush1.msra.mxu0 0.0
        %1708 = vmatprep.subr.mxu0 0.0
        %1709 = vmatpush1.msra.mxu0 0.0
        %1710 = vmatprep.subr.mxu0 0.0
        %1711 = vmatpush1.msra.mxu0 0.0
        %1712 = vmatprep.subr.mxu0 0.0
        %1713 = vmatpush1.msra.mxu0 0.0
        %1714 = vmatprep.subr.mxu0 0.0
        %1715 = vmatpush1.msra.mxu0 0.0
        %1716 = vmatprep.subr.mxu0 0.0
        %1717 = vmatpush1.msra.mxu0 0.0
        %1718 = vmatprep.subr.mxu0 0.0
        %1719 = vmatpush1.msra.mxu0 0.0
        %1720 = vmatprep.subr.mxu0 0.0
        %1721 = vmatpush1.msra.mxu0 0.0
        %1722 = vmatprep.subr.mxu0 0.0
        %1723 = vmatpush1.msra.mxu0 0.0
        %1724 = vmatprep.subr.mxu0 0.0
        %1725 = vmatpush1.msra.mxu0 0.0
        %1726 = vmatprep.subr.mxu0 0.0
        %1727 = vmatpush1.msra.mxu0 0.0
        %1728 = vmatprep.subr.mxu0 0.0
        %1729 = vmatpush1.msra.mxu0 0.0
        %1730 = vmatprep.subr.mxu0 0.0
        %1731 = vmatpush1.msra.mxu0 0.0
        %1732 = vmatprep.subr.mxu0 0.0
        %1733 = vmatpush1.msra.mxu0 0.0
        %1734 = vmatprep.subr.mxu0 0.0
        %1735 = vmatpush1.msra.mxu0 0.0
        %1736 = vmatprep.mubr.f32.mxu0 0.0
        %1737 = vmatmul.mubr.f32.gmra.mrb[0].mxu0 %v1670
        %v1738 = vpop.f32.mrb[0].mxu0
        %v1739 = vadd.f32 %v1667, %v1738
        %v1740 = vpop.f32.mrb[0].mxu0
        %1741 = vdwg.mxu0
        %v1742 = vmax.f32 %v1739, 0.0
        %v1743 = vld [vmem:[%s731] sm:$0xff]
        %v1744 = vld [vmem:[%s731 + $0x8] sm:$0xff]
        %v1745 = vld [vmem:[%s731 + $0x10] sm:$0xff]
        %v1746 = vld [vmem:[%s731 + $0x18] sm:$0xff]
        %v1747 = vld [vmem:[%s731 + $0x20] sm:$0xff]
        %v1748 = vld [vmem:[%s731 + $0x28] sm:$0xff]
        %v1749 = vld [vmem:[%s731 + $0x30] sm:$0xff]
        %v1750 = vld [vmem:[%s731 + $0x38] sm:$0xff]
        %v1751 = vld [vmem:[%s734] sm:$0x1]
        %v1753 = vlaneseq
        %v1754 = vshrl.u32 %v1753, 7
        %v1755 = vsub.s32 0, %v1754
        %v1756 = vrot.slane %v1751, %v1755
        %vm1758 = vcmask 523264
        %v1760 = vsel %vm1758, %v1742, 0
        %1762 = vmatprep.subr.mxu0 0.0
        %1763 = vmatpush1.msra.mxu0 %v1743
        %1764 = vmatprep.subr.mxu0 0.0
        %1765 = vmatpush1.msra.mxu0 %v1744
        %1766 = vmatprep.subr.mxu0 0.0
        %1767 = vmatpush1.msra.mxu0 %v1745
        %1768 = vmatprep.subr.mxu0 0.0
        %1769 = vmatpush1.msra.mxu0 %v1746
        %1770 = vmatprep.subr.mxu0 0.0
        %1771 = vmatpush1.msra.mxu0 %v1747
        %1772 = vmatprep.subr.mxu0 0.0
        %1773 = vmatpush1.msra.mxu0 %v1748
        %1774 = vmatprep.subr.mxu0 0.0
        %1775 = vmatpush1.msra.mxu0 %v1749
        %1776 = vmatprep.subr.mxu0 0.0
        %1777 = vmatpush1.msra.mxu0 %v1750
        %1778 = vmatprep.subr.mxu0 0.0
        %1779 = vmatpush1.msra.mxu0 0.0
        %1780 = vmatprep.subr.mxu0 0.0
        %1781 = vmatpush1.msra.mxu0 0.0
        %1782 = vmatprep.subr.mxu0 0.0
        %1783 = vmatpush1.msra.mxu0 0.0
        %1784 = vmatprep.subr.mxu0 0.0
        %1785 = vmatpush1.msra.mxu0 0.0
        %1786 = vmatprep.subr.mxu0 0.0
        %1787 = vmatpush1.msra.mxu0 0.0
        %1788 = vmatprep.subr.mxu0 0.0
        %1789 = vmatpush1.msra.mxu0 0.0
        %1790 = vmatprep.subr.mxu0 0.0
        %1791 = vmatpush1.msra.mxu0 0.0
        %1792 = vmatprep.subr.mxu0 0.0
        %1793 = vmatpush1.msra.mxu0 0.0
        %1794 = vmatprep.subr.mxu0 0.0
        %1795 = vmatpush1.msra.mxu0 0.0
        %1796 = vmatprep.subr.mxu0 0.0
        %1797 = vmatpush1.msra.mxu0 0.0
        %1798 = vmatprep.subr.mxu0 0.0
        %1799 = vmatpush1.msra.mxu0 0.0
        %1800 = vmatprep.subr.mxu0 0.0
        %1801 = vmatpush1.msra.mxu0 0.0
        %1802 = vmatprep.subr.mxu0 0.0
        %1803 = vmatpush1.msra.mxu0 0.0
        %1804 = vmatprep.subr.mxu0 0.0
        %1805 = vmatpush1.msra.mxu0 0.0
        %1806 = vmatprep.subr.mxu0 0.0
        %1807 = vmatpush1.msra.mxu0 0.0
        %1808 = vmatprep.subr.mxu0 0.0
        %1809 = vmatpush1.msra.mxu0 0.0
        %1810 = vmatprep.subr.mxu0 0.0
        %1811 = vmatpush1.msra.mxu0 0.0
        %1812 = vmatprep.subr.mxu0 0.0
        %1813 = vmatpush1.msra.mxu0 0.0
        %1814 = vmatprep.subr.mxu0 0.0
        %1815 = vmatpush1.msra.mxu0 0.0
        %1816 = vmatprep.subr.mxu0 0.0
        %1817 = vmatpush1.msra.mxu0 0.0
        %1818 = vmatprep.subr.mxu0 0.0
        %1819 = vmatpush1.msra.mxu0 0.0
        %1820 = vmatprep.subr.mxu0 0.0
        %1821 = vmatpush1.msra.mxu0 0.0
        %1822 = vmatprep.subr.mxu0 0.0
        %1823 = vmatpush1.msra.mxu0 0.0
        %1824 = vmatprep.subr.mxu0 0.0
        %1825 = vmatpush1.msra.mxu0 0.0
        %1826 = vmatprep.mubr.f32.mxu0 0.0
        %1827 = vmatmul.mubr.f32.gmra.mrb[0].mxu0 %v1760
        %v1828 = vpop.f32.mrb[0].mxu0
        %v1829 = vadd.f32 %v1756, %v1828
        %v1830 = vpop.f32.mrb[0].mxu0
        %1831 = vdwg.mxu0
        %v1832 = vadd.f32 %v1829, %v1628
        %1833 = vst.msk [vmem:[#allocation2] sm:$0xff] %vm745, %v1832
        %p1834 = scmp.eq.s32.totalorder %s35, 1
        // Predicated region
        $region89: #{encoder_forward.1} parent=83 // pred_check
          %p1835 = pneg %p1834
        $region90: #{encoder_forward.1} parent=83 // pred_check_branch
          %1837 = sbr.rel (%p1835) target = $region92
        $region91: #{encoder_forward.1} parent=83 // pred_region
          %v1838 = vld [vmem:[%s14] sm:$0x1]
          %v1839 = vld [vmem:[%s15] sm:$0x1]
          %v1840 = vsel %vm745, %v1832, 0.0
          %1841 = vadd.xlane.f32.xlu0 %v1840
          %v1842 = vpop.xlane.xlu0 %1841
          %v1843 = vmul.f32 %v1842, %v749
          %v1844 = vsub.f32 %v1832, %v1843
          %v1845 = vmul.f32 %v1844, %v1844
          %v1846 = vsel %vm745, %v1845, 0.0
          %1847 = vadd.xlane.f32.xlu0 %v1846
          %v1848 = vpop.xlane.xlu0 %1847
          %v1849 = vmul.f32 %v1848, %v749
          %v1850 = vadd.f32 %v1849, 1e-05
          %v1851 = vrsqrt.pop %v1850
          %v1852 = vmul.f32 %v1844, %v1851
          %v1854 = vlaneseq
          %v1855 = vshrl.u32 %v1854, 7
          %v1856 = vsub.s32 0, %v1855
          %v1857 = vrot.slane %v1838, %v1856
          %v1859 = vmul.f32 %v1852, %v1857
          %v1861 = vlaneseq
          %v1862 = vshrl.u32 %v1861, 7
          %v1863 = vsub.s32 0, %v1862
          %v1864 = vrot.slane %v1839, %v1863
          %v1866 = vadd.f32 %v1859, %v1864
          %1867 = vst.msk [vmem:[%s683] sm:$0xff] %vm745, %v1866
        $region92: #{encoder_forward.1} parent=83 // pred_fallthru
          _
        %s1868 = sand.u32 %s456, 1
        %s1869 = scalar_lea.sflag [#allocation4], %s1868
        %s1870 = sand.u32 %s456, 1
        %s1871 = smul.addr %s1870, 8
        %s1872 = scalar_lea.vmem [#allocation3], %s1871
        // Predicated region
        $region93: #{encoder_forward.1} parent=83 // pred_check
          %p1873 = pneg %p466
        $region94: #{encoder_forward.1} parent=83 // pred_check_branch
          %1875 = sbr.rel (%p1873) target = $region96
        $region95: #{encoder_forward.1} parent=83 // pred_region
          %s1877 = ssub.s32 128, 128
          %1878 = vsyncadd %s1869, %s1877
          %s1879 = smul.addr %s34, 128
          %s1880 = scalar_lea.hbm %s16, %s1879
          %s1882 = sshll.u32 %s1872, 4
          %s1883 = int_to_ptr.vmem [resolvable:$true] %s1882
          %1885 = dma.vmem_to_hbm [thread:$0]  %s1883, 128, %s1880, %s1869
        $region96: #{encoder_forward.1} parent=83 // pred_fallthru
          _
      $region84: #{encoder_forward.1} parent=5 // pred_fallthru
        _
      %p1886 = scmp.le.s32.totalorder 2, %s25
      // Predicated region
      $region97: #{encoder_forward.1} parent=5 // pred_check
        %p1887 = pneg %p1886
      $region98: #{encoder_forward.1} parent=5 // pred_check_branch
        %1889 = sbr.rel (%p1887) target = $region100
      $region99: #{encoder_forward.1} parent=5 // pred_region
        %s1890 = ssub.s32 %s25, 2
        // Predicated region
        $region101: #{encoder_forward.1} parent=99 // pred_check
          %p1891 = pneg %p472
        $region102: #{encoder_forward.1} parent=99 // pred_check_branch
          %1893 = sbr.rel (%p1891) target = $region104
        $region103: #{encoder_forward.1} parent=99 // pred_region
          %s1894 = sand.u32 %s457, 1
          %s1895 = scalar_lea.sflag [#allocation4], %s1894
          %s1896 = sand.u32 %s457, 1
          %s1897 = smul.addr %s1896, 8
          %s1898 = scalar_lea.vmem [#allocation3], %s1897
          %1899 = dma.done %s1895, 128
        $region104: #{encoder_forward.1} parent=99 // pred_fallthru
          _
      $region100: #{encoder_forward.1} parent=5 // pred_fallthru
        _
    $region6: #{encoder_forward.1} parent=1 // loop_footer
      %s29 = sadd.s32 1, %s25
    $region7: #{encoder_forward.1} parent=1 // loop_footer_branch
      %24 = sbr.rel target = $region3
    $region8: #{encoder_forward.1} parent=1 // loop_exit
      _
    %1900 = vsyncpa [#allocation4], 1
    %s1901 = scalar_lea.sflag [#allocation4], 1
    %1902 = vsyncpa %s1901, 1

</llo_original>
